<compile_context>
chip_gen: v7x
topology: tpu7x:2x2x1
jax: 0.10.0
libtpu: 0.0.40
codegen_flags: <defaults>
</compile_context>

<pallas_src>
import jax
import jax.numpy as jnp
from jax.experimental import pallas as pl
from jax.experimental.pallas import tpu as pltpu


def _seres_kernel(x_ref, m1_ref, b1_ref, m2_ref, b2_ref,
                  mt_ref, mb_ref, pool_wd_ref, bd_ref, wu_wc_ref, bu_wc_ref,
                  segp_ref, segb_ref, out_ref):
    # x_ref / out_ref: (M, WC) lane-dense slab holding TB = M // H images stacked in rows.
    x = x_ref[...]                       # f32 (M, WC)
    M = x.shape[0]

    def conv(inp, m_ref, b_ref):
        # "same" 3x3 conv: W-direction taps + zero padding live in the block-banded
        # (WC, WC) matrices; H-direction taps are XLU sublane rolls + per-image border
        # masks (zero padding in H, and no cross-image leakage within the slab).
        up = pltpu.roll(inp, 1, axis=0) * mt_ref[...]        # rows h-1 (0 at h == 0)
        dn = pltpu.roll(inp, M - 1, axis=0) * mb_ref[...]    # rows h+1 (0 at h == H-1)
        acc = jnp.dot(up.astype(jnp.bfloat16), m_ref[0],
                      preferred_element_type=jnp.float32)
        acc = acc + jnp.dot(inp.astype(jnp.bfloat16), m_ref[1],
                            preferred_element_type=jnp.float32)
        acc = acc + jnp.dot(dn.astype(jnp.bfloat16), m_ref[2],
                            preferred_element_type=jnp.float32)
        return acc + b_ref[...]                              # lane-tiled bias (f32)

    h1 = jnp.maximum(conv(x, m1_ref, b1_ref), 0.0)           # conv1 + ReLU (f32)
    h2 = conv(h1, m2_ref, b2_ref)                            # conv2 (f32)

    # ---- SELayer (per image): avg pool -> 1x1 conv -> ReLU -> 1x1 conv -> sigmoid ----
    # seg_pool folds the TB image blocks (rows) with the 1/(H*W) mean factor; pool_wd
    # already contains the lane-pool (W-tiled eye) fused with the squeeze weight; the
    # excite weight/bias are pre-broadcast to lane-dense (Cr, WC)/(1, WC) so no separate
    # broadcast matmul is needed after the sigmoid.
    pooled = jnp.dot(segp_ref[...], h2, preferred_element_type=jnp.float32)       # (TB, WC)
    z = jnp.maximum(
        jnp.dot(pooled, pool_wd_ref[...], preferred_element_type=jnp.float32)
        + bd_ref[...], 0.0)                                                        # (TB, Cr)
    s_wc = jax.nn.sigmoid(
        jnp.dot(z, wu_wc_ref[...], preferred_element_type=jnp.float32)
        + bu_wc_ref[...])                                                          # (TB, WC)
    scale = jnp.dot(segb_ref[...], s_wc, preferred_element_type=jnp.float32)       # (M, WC)

    # channel-wise scaling + residual add; dense, lane-aligned store.
    out_ref[...] = (h2 * scale + x).astype(out_ref.dtype)


def _banded_conv_mats(w, w_dim, pad):
    """(KH, KW, Cin, Cout) conv weight -> (KH, W*C, W*C) block-banded matmul weights.

    M_kh[w_in*C + ci, w_out*C + co] = w[kh, w_in - w_out + pad, ci, co] (0 elsewhere),
    so (row-shifted x) @ M_kh performs all KW taps + W-direction zero padding at once.
    """
    KH, KW, C, _ = w.shape
    mats = []
    for kh in range(KH):
        m = jnp.zeros((w_dim * C, w_dim * C), jnp.float32)
        for kw in range(KW):
            shift = jnp.eye(w_dim, w_dim, k=pad - kw, dtype=jnp.float32)
            m = m + jnp.kron(shift, w[kh, kw].astype(jnp.float32))
        mats.append(m)
    return jnp.stack(mats, axis=0)


def seres_block_nhwc(x_nhwc, params, kernel_size=3, rows_target=256):
    """Pallas SEResBlock forward, NHWC layout (preferred API: no relayout copies).

    rows_target: target matmul M per grid step (256 for v6e/v7x, 128 for v5e).
    """
    assert kernel_size == 3, "kernel hard-codes the 3 H-taps"
    w1, b1, w2, b2, wd, bd, wu, bu = params
    N, H, W, C = x_nhwc.shape
    KH = kernel_size
    pad = kernel_size // 2
    Cr = wd.shape[1]
    WC = W * C

    # Images per grid step (fold batch into matmul M); must divide N.
    tb_max = max(1, min(N, rows_target // H))
    TB = 1
    for t in range(tb_max, 0, -1):
        if N % t == 0:
            TB = t
            break
    M_rows = TB * H
    assert M_rows % 8 == 0 and WC % 128 == 0, (
        "lane-dense layout needs TB*H % 8 == 0 and W*C % 128 == 0")

    # (N, H, W, C) -> (N//TB, TB*H, W*C): contiguous, free metadata reshape.
    x = x_nhwc.astype(jnp.float32).reshape(N // TB, M_rows, WC)

    # ---- constant preprocessing (done once, outside the kernel) ----
    m1 = _banded_conv_mats(w1, W, pad).astype(jnp.bfloat16)      # (KH, WC, WC) bf16
    m2 = _banded_conv_mats(w2, W, pad).astype(jnp.bfloat16)
    b1r = jnp.tile(jnp.reshape(b1, (-1,)), W).reshape(1, WC).astype(jnp.float32)
    b2r = jnp.tile(jnp.reshape(b2, (-1,)), W).reshape(1, WC).astype(jnp.float32)

    # Per-image H-border masks for the rolled conv taps (hoisted out of the kernel).
    local = jnp.arange(M_rows, dtype=jnp.int32) % H
    mask_top = (local != 0).astype(jnp.float32).reshape(M_rows, 1)
    mask_bot = (local != H - 1).astype(jnp.float32).reshape(M_rows, 1)

    # SE constants: fold lane-pool into the squeeze weight and lane-broadcast into the
    # excite weight/bias; block-indicator matrices fold/expand the TB images per slab.
    eyeC = jnp.eye(C, dtype=jnp.float32)
    pool_wd = jnp.tile(eyeC, (W, 1)) @ wd.astype(jnp.float32)           # (WC, Cr)
    wu_wc = wu.astype(jnp.float32) @ jnp.tile(eyeC, (1, W))             # (Cr, WC)
    bu_wc = jnp.tile(jnp.reshape(bu, (-1,)), W).reshape(1, WC).astype(jnp.float32)
    bd_r = jnp.reshape(bd, (1, Cr)).astype(jnp.float32)
    img_of_row = jnp.arange(M_rows) // H
    segp = (jnp.arange(TB)[:, None] == img_of_row[None, :]).astype(jnp.float32) / float(H * W)  # (TB, M)
    segb = (img_of_row[:, None] == jnp.arange(TB)[None, :]).astype(jnp.float32)                 # (M, TB)

    out = pl.pallas_call(
        _seres_kernel,
        out_shape=jax.ShapeDtypeStruct((N // TB, M_rows, WC), jnp.float32),
        grid_spec=pltpu.PrefetchScalarGridSpec(
            num_scalar_prefetch=0,
            grid=(N // TB,),   # batch tiles; "parallel" -> shards across v7x's two TCs
            in_specs=[
                pl.BlockSpec((None, M_rows, WC), lambda g: (g, 0, 0)),  # x slab (lane-dense)
                pl.BlockSpec((KH, WC, WC), lambda g: (0, 0, 0)),        # conv1 banded mats (bf16)
                pl.BlockSpec((1, WC), lambda g: (0, 0)),                # conv1 bias (lane-tiled)
                pl.BlockSpec((KH, WC, WC), lambda g: (0, 0, 0)),        # conv2 banded mats (bf16)
                pl.BlockSpec((1, WC), lambda g: (0, 0)),                # conv2 bias (lane-tiled)
                pl.BlockSpec((M_rows, 1), lambda g: (0, 0)),            # top-border mask
                pl.BlockSpec((M_rows, 1), lambda g: (0, 0)),            # bottom-border mask
                pl.BlockSpec((WC, Cr), lambda g: (0, 0)),               # pool (x) squeeze weight
                pl.BlockSpec((1, Cr), lambda g: (0, 0)),                # squeeze bias
                pl.BlockSpec((Cr, WC), lambda g: (0, 0)),               # excite weight (lane-bcast)
                pl.BlockSpec((1, WC), lambda g: (0, 0)),                # excite bias (lane-bcast)
                pl.BlockSpec((TB, M_rows), lambda g: (0, 0)),           # per-image pooling fold
                pl.BlockSpec((M_rows, TB), lambda g: (0, 0)),           # per-image row broadcast
            ],
            out_specs=pl.BlockSpec((None, M_rows, WC), lambda g: (g, 0, 0)),
        ),
        compiler_params=pltpu.CompilerParams(dimension_semantics=("parallel",)),
    )(x, m1, b1r, m2, b2r, mask_top, mask_bot,
      pool_wd, bd_r, wu_wc, bu_wc, segp, segb)

    return out.reshape(N, H, W, C)


def seres_block(x_nchw, params, kernel_size=3, rows_target=256):
    """NCHW wrapper for parity with the PyTorch module.

    NOTE: the NCHW<->NHWC transposes below are real XLA relayouts (extra HBM traffic on
    x and out); production callers should use seres_block_nhwc directly.
    """
    x_nhwc = jnp.transpose(x_nchw, (0, 2, 3, 1))
    out = seres_block_nhwc(x_nhwc, params, kernel_size=kernel_size, rows_target=rows_target)
    return jnp.transpose(out, (0, 3, 1, 2))


def seres_reference(x_nchw, params, kernel_size=3):
    """Pure-JAX reference matching the PyTorch forward (for sanity checking)."""
    w1, b1, w2, b2, wd, bd, wu, bu = params
    pad = kernel_size // 2
    x = jnp.transpose(x_nchw, (0, 2, 3, 1))

    def conv(inp, w, b):
        y = jax.lax.conv_general_dilated(
            inp, w, window_strides=(1, 1), padding=((pad, pad), (pad, pad)),
            dimension_numbers=('NHWC', 'HWIO', 'NHWC'))
        return y + b.reshape(1, 1, 1, -1)

    h = jnp.maximum(conv(x, w1, b1), 0.0)
    h = conv(h, w2, b2)
    pooled = jnp.mean(h, axis=(1, 2))                     # adaptive avg pool to 1x1
    z = jnp.maximum(pooled @ wd + bd, 0.0)
    s = jax.nn.sigmoid(z @ wu + bu)
    res = h * s[:, None, None, :] + x
    return jnp.transpose(res, (0, 3, 1, 2))


if __name__ == "__main__":
    # Small shapes consistent with SEResBlock(conv, n_feat=16, kernel_size=3, reduction=4)
    N, C, H, W = 2, 16, 16, 16
    kernel_size, reduction = 3, 4
    Cr = C // reduction

    key = jax.random.PRNGKey(0)
    ks = jax.random.split(key, 9)
    x = jax.random.normal(ks[0], (N, C, H, W), jnp.float32)

    # Deterministic synthetic parameters (PyTorch shapes re-expressed channels-last / HWIO).
    w1 = 0.1 * jax.random.normal(ks[1], (kernel_size, kernel_size, C, C), jnp.float32)
    b1 = 0.1 * jax.random.normal(ks[2], (1, C), jnp.float32)
    w2 = 0.1 * jax.random.normal(ks[3], (kernel_size, kernel_size, C, C), jnp.float32)
    b2 = 0.1 * jax.random.normal(ks[4], (1, C), jnp.float32)
    wd = 0.1 * jax.random.normal(ks[5], (C, Cr), jnp.float32)   # SE squeeze 1x1 conv
    bd = 0.1 * jax.random.normal(ks[6], (1, Cr), jnp.float32)
    wu = 0.1 * jax.random.normal(ks[7], (Cr, C), jnp.float32)   # SE excite 1x1 conv
    bu = 0.1 * jax.random.normal(ks[8], (1, C), jnp.float32)
    params = (w1, b1, w2, b2, wd, bd, wu, bu)

    out = seres_block(x, params, kernel_size=kernel_size)
    out = jax.block_until_ready(out)

    ref = jax.block_until_ready(seres_reference(x, params, kernel_size=kernel_size))
    assert out.shape == (N, C, H, W)
    assert bool(jnp.all(jnp.isfinite(out)))
    assert bool(jnp.allclose(out, ref, atol=5e-2, rtol=5e-2)), "mismatch vs reference"

    print("KERNEL_OK")
</pallas_src>

<mosaic_0001>
module attributes {stable_mosaic.version = 11 : i64} {
  func.func @_seres_kernel(%arg0: i32, %arg1: memref<1x32x256xf32, #tpu.memory_space<vmem>>, %arg2: memref<3x256x256xbf16, #tpu.memory_space<vmem>>, %arg3: memref<1x256xf32, #tpu.memory_space<vmem>>, %arg4: memref<3x256x256xbf16, #tpu.memory_space<vmem>>, %arg5: memref<1x256xf32, #tpu.memory_space<vmem>>, %arg6: memref<32x1xf32, #tpu.memory_space<vmem>>, %arg7: memref<32x1xf32, #tpu.memory_space<vmem>>, %arg8: memref<256x4xf32, #tpu.memory_space<vmem>>, %arg9: memref<1x4xf32, #tpu.memory_space<vmem>>, %arg10: memref<4x256xf32, #tpu.memory_space<vmem>>, %arg11: memref<1x256xf32, #tpu.memory_space<vmem>>, %arg12: memref<2x32xf32, #tpu.memory_space<vmem>>, %arg13: memref<32x2xf32, #tpu.memory_space<vmem>>, %arg14: memref<1x32x256xf32, #tpu.memory_space<vmem>>) attributes {dimension_semantics = [#tpu.dimension_semantics<parallel>], iteration_bounds = array<i64: 1>, scalar_prefetch = 0 : i64, scratch_operands = 0 : i64, tpu.core_type = #tpu.core_type<tc>, window_params = [{transform_indices = @transform_0, window_bounds = array<i64: 1, 32, 256>}, {pipeline_mode = #tpu.pipeline_mode<synchronous>, transform_indices = @transform_1, window_bounds = array<i64: 3, 256, 256>}, {pipeline_mode = #tpu.pipeline_mode<synchronous>, transform_indices = @transform_2, window_bounds = array<i64: 1, 256>}, {pipeline_mode = #tpu.pipeline_mode<synchronous>, transform_indices = @transform_3, window_bounds = array<i64: 3, 256, 256>}, {pipeline_mode = #tpu.pipeline_mode<synchronous>, transform_indices = @transform_4, window_bounds = array<i64: 1, 256>}, {pipeline_mode = #tpu.pipeline_mode<synchronous>, transform_indices = @transform_5, window_bounds = array<i64: 32, 1>}, {pipeline_mode = #tpu.pipeline_mode<synchronous>, transform_indices = @transform_6, window_bounds = array<i64: 32, 1>}, {pipeline_mode = #tpu.pipeline_mode<synchronous>, transform_indices = @transform_7, window_bounds = array<i64: 256, 4>}, {pipeline_mode = #tpu.pipeline_mode<synchronous>, transform_indices = @transform_8, window_bounds = array<i64: 1, 4>}, {pipeline_mode = #tpu.pipeline_mode<synchronous>, transform_indices = @transform_9, window_bounds = array<i64: 4, 256>}, {pipeline_mode = #tpu.pipeline_mode<synchronous>, transform_indices = @transform_10, window_bounds = array<i64: 1, 256>}, {pipeline_mode = #tpu.pipeline_mode<synchronous>, transform_indices = @transform_11, window_bounds = array<i64: 2, 32>}, {pipeline_mode = #tpu.pipeline_mode<synchronous>, transform_indices = @transform_12, window_bounds = array<i64: 32, 2>}, {transform_indices = @transform_13, window_bounds = array<i64: 1, 32, 256>}]} {
    %c0 = arith.constant 0 : index
    %c0_0 = arith.constant 0 : index
    %c0_1 = arith.constant 0 : index
    %0 = vector.load %arg1[%c0, %c0_0, %c0_1] : memref<1x32x256xf32, #tpu.memory_space<vmem>>, vector<1x32x256xf32>
    %1 = vector.shape_cast %0 : vector<1x32x256xf32> to vector<32x256xf32>
    %c1_i32 = arith.constant 1 : i32
    %2 = tpu.dynamic_rotate %1 by %c1_i32 dim 0 : vector<32x256xf32>, i32 -> vector<32x256xf32>
    %c0_2 = arith.constant 0 : index
    %c0_3 = arith.constant 0 : index
    %3 = vector.load %arg6[%c0_2, %c0_3] : memref<32x1xf32, #tpu.memory_space<vmem>>, vector<32x1xf32>
    %4 = vector.broadcast %3 : vector<32x1xf32> to vector<32x256xf32>
    %5 = arith.mulf %2, %4 : vector<32x256xf32>
    %c31_i32 = arith.constant 31 : i32
    %6 = tpu.dynamic_rotate %1 by %c31_i32 dim 0 : vector<32x256xf32>, i32 -> vector<32x256xf32>
    %c0_4 = arith.constant 0 : index
    %c0_5 = arith.constant 0 : index
    %7 = vector.load %arg7[%c0_4, %c0_5] : memref<32x1xf32, #tpu.memory_space<vmem>>, vector<32x1xf32>
    %8 = vector.broadcast %7 : vector<32x1xf32> to vector<32x256xf32>
    %9 = arith.mulf %6, %8 : vector<32x256xf32>
    %10 = arith.truncf %5 : vector<32x256xf32> to vector<32x256xbf16>
    %c0_6 = arith.constant 0 : index
    %c0_7 = arith.constant 0 : index
    %c0_8 = arith.constant 0 : index
    %11 = vector.load %arg2[%c0_6, %c0_7, %c0_8] : memref<3x256x256xbf16, #tpu.memory_space<vmem>>, vector<1x256x256xbf16>
    %12 = vector.shape_cast %11 : vector<1x256x256xbf16> to vector<256x256xbf16>
    %cst = arith.constant dense<0.000000e+00> : vector<32x256xf32>
    %13 = tpu.matmul %10, %12, %cst {dimension_numbers = #tpu.dot_dimension_numbers<[1], [0], [0], [1], [0, 0, 1, 1], [], []>} : vector<32x256xbf16>, vector<256x256xbf16>, vector<32x256xf32> -> vector<32x256xf32>
    %14 = arith.truncf %1 : vector<32x256xf32> to vector<32x256xbf16>
    %c1 = arith.constant 1 : index
    %c0_9 = arith.constant 0 : index
    %c0_10 = arith.constant 0 : index
    %15 = vector.load %arg2[%c1, %c0_9, %c0_10] : memref<3x256x256xbf16, #tpu.memory_space<vmem>>, vector<1x256x256xbf16>
    %16 = vector.shape_cast %15 : vector<1x256x256xbf16> to vector<256x256xbf16>
    %cst_11 = arith.constant dense<0.000000e+00> : vector<32x256xf32>
    %17 = tpu.matmul %14, %16, %cst_11 {dimension_numbers = #tpu.dot_dimension_numbers<[1], [0], [0], [1], [0, 0, 1, 1], [], []>} : vector<32x256xbf16>, vector<256x256xbf16>, vector<32x256xf32> -> vector<32x256xf32>
    %18 = arith.addf %13, %17 : vector<32x256xf32>
    %19 = arith.truncf %9 : vector<32x256xf32> to vector<32x256xbf16>
    %c2 = arith.constant 2 : index
    %c0_12 = arith.constant 0 : index
    %c0_13 = arith.constant 0 : index
    %20 = vector.load %arg2[%c2, %c0_12, %c0_13] : memref<3x256x256xbf16, #tpu.memory_space<vmem>>, vector<1x256x256xbf16>
    %21 = vector.shape_cast %20 : vector<1x256x256xbf16> to vector<256x256xbf16>
    %cst_14 = arith.constant dense<0.000000e+00> : vector<32x256xf32>
    %22 = tpu.matmul %19, %21, %cst_14 {dimension_numbers = #tpu.dot_dimension_numbers<[1], [0], [0], [1], [0, 0, 1, 1], [], []>} : vector<32x256xbf16>, vector<256x256xbf16>, vector<32x256xf32> -> vector<32x256xf32>
    %23 = arith.addf %18, %22 : vector<32x256xf32>
    %c0_15 = arith.constant 0 : index
    %c0_16 = arith.constant 0 : index
    %24 = vector.load %arg3[%c0_15, %c0_16] : memref<1x256xf32, #tpu.memory_space<vmem>>, vector<1x256xf32>
    %25 = vector.broadcast %24 : vector<1x256xf32> to vector<32x256xf32>
    %26 = arith.addf %23, %25 : vector<32x256xf32>
    %cst_17 = arith.constant 0.000000e+00 : f32
    %27 = vector.broadcast %cst_17 : f32 to vector<32x256xf32>
    %28 = arith.maximumf %26, %27 : vector<32x256xf32>
    %c1_i32_18 = arith.constant 1 : i32
    %29 = tpu.dynamic_rotate %28 by %c1_i32_18 dim 0 : vector<32x256xf32>, i32 -> vector<32x256xf32>
    %c0_19 = arith.constant 0 : index
    %c0_20 = arith.constant 0 : index
    %30 = vector.load %arg6[%c0_19, %c0_20] : memref<32x1xf32, #tpu.memory_space<vmem>>, vector<32x1xf32>
    %31 = vector.broadcast %30 : vector<32x1xf32> to vector<32x256xf32>
    %32 = arith.mulf %29, %31 : vector<32x256xf32>
    %c31_i32_21 = arith.constant 31 : i32
    %33 = tpu.dynamic_rotate %28 by %c31_i32_21 dim 0 : vector<32x256xf32>, i32 -> vector<32x256xf32>
    %c0_22 = arith.constant 0 : index
    %c0_23 = arith.constant 0 : index
    %34 = vector.load %arg7[%c0_22, %c0_23] : memref<32x1xf32, #tpu.memory_space<vmem>>, vector<32x1xf32>
    %35 = vector.broadcast %34 : vector<32x1xf32> to vector<32x256xf32>
    %36 = arith.mulf %33, %35 : vector<32x256xf32>
    %37 = arith.truncf %32 : vector<32x256xf32> to vector<32x256xbf16>
    %c0_24 = arith.constant 0 : index
    %c0_25 = arith.constant 0 : index
    %c0_26 = arith.constant 0 : index
    %38 = vector.load %arg4[%c0_24, %c0_25, %c0_26] : memref<3x256x256xbf16, #tpu.memory_space<vmem>>, vector<1x256x256xbf16>
    %39 = vector.shape_cast %38 : vector<1x256x256xbf16> to vector<256x256xbf16>
    %cst_27 = arith.constant dense<0.000000e+00> : vector<32x256xf32>
    %40 = tpu.matmul %37, %39, %cst_27 {dimension_numbers = #tpu.dot_dimension_numbers<[1], [0], [0], [1], [0, 0, 1, 1], [], []>} : vector<32x256xbf16>, vector<256x256xbf16>, vector<32x256xf32> -> vector<32x256xf32>
    %41 = arith.truncf %28 : vector<32x256xf32> to vector<32x256xbf16>
    %c1_28 = arith.constant 1 : index
    %c0_29 = arith.constant 0 : index
    %c0_30 = arith.constant 0 : index
    %42 = vector.load %arg4[%c1_28, %c0_29, %c0_30] : memref<3x256x256xbf16, #tpu.memory_space<vmem>>, vector<1x256x256xbf16>
    %43 = vector.shape_cast %42 : vector<1x256x256xbf16> to vector<256x256xbf16>
    %cst_31 = arith.constant dense<0.000000e+00> : vector<32x256xf32>
    %44 = tpu.matmul %41, %43, %cst_31 {dimension_numbers = #tpu.dot_dimension_numbers<[1], [0], [0], [1], [0, 0, 1, 1], [], []>} : vector<32x256xbf16>, vector<256x256xbf16>, vector<32x256xf32> -> vector<32x256xf32>
    %45 = arith.addf %40, %44 : vector<32x256xf32>
    %46 = arith.truncf %36 : vector<32x256xf32> to vector<32x256xbf16>
    %c2_32 = arith.constant 2 : index
    %c0_33 = arith.constant 0 : index
    %c0_34 = arith.constant 0 : index
    %47 = vector.load %arg4[%c2_32, %c0_33, %c0_34] : memref<3x256x256xbf16, #tpu.memory_space<vmem>>, vector<1x256x256xbf16>
    %48 = vector.shape_cast %47 : vector<1x256x256xbf16> to vector<256x256xbf16>
    %cst_35 = arith.constant dense<0.000000e+00> : vector<32x256xf32>
    %49 = tpu.matmul %46, %48, %cst_35 {dimension_numbers = #tpu.dot_dimension_numbers<[1], [0], [0], [1], [0, 0, 1, 1], [], []>} : vector<32x256xbf16>, vector<256x256xbf16>, vector<32x256xf32> -> vector<32x256xf32>
    %50 = arith.addf %45, %49 : vector<32x256xf32>
    %c0_36 = arith.constant 0 : index
    %c0_37 = arith.constant 0 : index
    %51 = vector.load %arg5[%c0_36, %c0_37] : memref<1x256xf32, #tpu.memory_space<vmem>>, vector<1x256xf32>
    %52 = vector.broadcast %51 : vector<1x256xf32> to vector<32x256xf32>
    %53 = arith.addf %50, %52 : vector<32x256xf32>
    %c0_38 = arith.constant 0 : index
    %c0_39 = arith.constant 0 : index
    %54 = vector.load %arg12[%c0_38, %c0_39] : memref<2x32xf32, #tpu.memory_space<vmem>>, vector<2x32xf32>
    %cst_40 = arith.constant dense<0.000000e+00> : vector<2x256xf32>
    %55 = tpu.matmul %54, %53, %cst_40 {dimension_numbers = #tpu.dot_dimension_numbers<[1], [0], [0], [1], [0, 0, 1, 1], [], []>} : vector<2x32xf32>, vector<32x256xf32>, vector<2x256xf32> -> vector<2x256xf32>
    %c0_41 = arith.constant 0 : index
    %c0_42 = arith.constant 0 : index
    %56 = vector.load %arg8[%c0_41, %c0_42] : memref<256x4xf32, #tpu.memory_space<vmem>>, vector<256x4xf32>
    %cst_43 = arith.constant dense<0.000000e+00> : vector<2x4xf32>
    %57 = tpu.matmul %55, %56, %cst_43 {dimension_numbers = #tpu.dot_dimension_numbers<[1], [0], [0], [1], [0, 0, 1, 1], [], []>} : vector<2x256xf32>, vector<256x4xf32>, vector<2x4xf32> -> vector<2x4xf32>
    %c0_44 = arith.constant 0 : index
    %c0_45 = arith.constant 0 : index
    %58 = vector.load %arg9[%c0_44, %c0_45] : memref<1x4xf32, #tpu.memory_space<vmem>>, vector<1x4xf32>
    %59 = vector.broadcast %58 : vector<1x4xf32> to vector<2x4xf32>
    %60 = arith.addf %57, %59 : vector<2x4xf32>
    %cst_46 = arith.constant 0.000000e+00 : f32
    %61 = vector.broadcast %cst_46 : f32 to vector<2x4xf32>
    %62 = arith.maximumf %60, %61 : vector<2x4xf32>
    %c0_47 = arith.constant 0 : index
    %c0_48 = arith.constant 0 : index
    %63 = vector.load %arg10[%c0_47, %c0_48] : memref<4x256xf32, #tpu.memory_space<vmem>>, vector<4x256xf32>
    %cst_49 = arith.constant dense<0.000000e+00> : vector<2x256xf32>
    %64 = tpu.matmul %62, %63, %cst_49 {dimension_numbers = #tpu.dot_dimension_numbers<[1], [0], [0], [1], [0, 0, 1, 1], [], []>} : vector<2x4xf32>, vector<4x256xf32>, vector<2x256xf32> -> vector<2x256xf32>
    %c0_50 = arith.constant 0 : index
    %c0_51 = arith.constant 0 : index
    %65 = vector.load %arg11[%c0_50, %c0_51] : memref<1x256xf32, #tpu.memory_space<vmem>>, vector<1x256xf32>
    %66 = vector.broadcast %65 : vector<1x256xf32> to vector<2x256xf32>
    %67 = arith.addf %64, %66 : vector<2x256xf32>
    %68 = arith.negf %67 : vector<2x256xf32>
    %69 = math.exp %68 : vector<2x256xf32>
    %cst_52 = arith.constant 1.000000e+00 : f32
    %70 = vector.broadcast %cst_52 : f32 to vector<2x256xf32>
    %71 = arith.addf %70, %69 : vector<2x256xf32>
    %72 = arith.divf %70, %71 : vector<2x256xf32>
    %c0_53 = arith.constant 0 : index
    %c0_54 = arith.constant 0 : index
    %73 = vector.load %arg13[%c0_53, %c0_54] : memref<32x2xf32, #tpu.memory_space<vmem>>, vector<32x2xf32>
    %cst_55 = arith.constant dense<0.000000e+00> : vector<32x256xf32>
    %74 = tpu.matmul %73, %72, %cst_55 {dimension_numbers = #tpu.dot_dimension_numbers<[1], [0], [0], [1], [0, 0, 1, 1], [], []>} : vector<32x2xf32>, vector<2x256xf32>, vector<32x256xf32> -> vector<32x256xf32>
    %75 = arith.mulf %53, %74 : vector<32x256xf32>
    %76 = arith.addf %75, %1 : vector<32x256xf32>
    %c0_56 = arith.constant 0 : index
    %c0_57 = arith.constant 0 : index
    %c0_58 = arith.constant 0 : index
    %77 = vector.load %arg14[%c0_56, %c0_57, %c0_58] : memref<1x32x256xf32, #tpu.memory_space<vmem>>, vector<1x32x256xf32>
    %78 = vector.shape_cast %77 : vector<1x32x256xf32> to vector<32x256xf32>
    %79 = vector.shape_cast %76 : vector<32x256xf32> to vector<1x32x256xf32>
    tpu.vector_store %arg14[%c0_56, %c0_57, %c0_58], %79 {strides = array<i32>} : memref<1x32x256xf32, #tpu.memory_space<vmem>>, vector<1x32x256xf32>,
    return
  }
  func.func @transform_0(%arg0: i32) -> (i32, i32, i32) {
    %c0_i32 = arith.constant 0 : i32
    %c0_i32_0 = arith.constant 0 : i32
    %c0_i32_1 = arith.constant 0 : i32
    return %arg0, %c0_i32, %c0_i32_0 : i32, i32, i32
  }
  func.func @transform_1(%arg0: i32) -> (i32, i32, i32) {
    %c0_i32 = arith.constant 0 : i32
    %c0_i32_0 = arith.constant 0 : i32
    %c0_i32_1 = arith.constant 0 : i32
    %c0_i32_2 = arith.constant 0 : i32
    return %c0_i32, %c0_i32_0, %c0_i32_1 : i32, i32, i32
  }
  func.func @transform_2(%arg0: i32) -> (i32, i32) {
    %c0_i32 = arith.constant 0 : i32
    %c0_i32_0 = arith.constant 0 : i32
    %c0_i32_1 = arith.constant 0 : i32
    return %c0_i32, %c0_i32_0 : i32, i32
  }
  func.func @transform_3(%arg0: i32) -> (i32, i32, i32) {
    %c0_i32 = arith.constant 0 : i32
    %c0_i32_0 = arith.constant 0 : i32
    %c0_i32_1 = arith.constant 0 : i32
    %c0_i32_2 = arith.constant 0 : i32
    return %c0_i32, %c0_i32_0, %c0_i32_1 : i32, i32, i32
  }
  func.func @transform_4(%arg0: i32) -> (i32, i32) {
    %c0_i32 = arith.constant 0 : i32
    %c0_i32_0 = arith.constant 0 : i32
    %c0_i32_1 = arith.constant 0 : i32
    return %c0_i32, %c0_i32_0 : i32, i32
  }
  func.func @transform_5(%arg0: i32) -> (i32, i32) {
    %c0_i32 = arith.constant 0 : i32
    %c0_i32_0 = arith.constant 0 : i32
    %c0_i32_1 = arith.constant 0 : i32
    return %c0_i32, %c0_i32_0 : i32, i32
  }
  func.func @transform_6(%arg0: i32) -> (i32, i32) {
    %c0_i32 = arith.constant 0 : i32
    %c0_i32_0 = arith.constant 0 : i32
    %c0_i32_1 = arith.constant 0 : i32
    return %c0_i32, %c0_i32_0 : i32, i32
  }
  func.func @transform_7(%arg0: i32) -> (i32, i32) {
    %c0_i32 = arith.constant 0 : i32
    %c0_i32_0 = arith.constant 0 : i32
    %c0_i32_1 = arith.constant 0 : i32
    return %c0_i32, %c0_i32_0 : i32, i32
  }
  func.func @transform_8(%arg0: i32) -> (i32, i32) {
    %c0_i32 = arith.constant 0 : i32
    %c0_i32_0 = arith.constant 0 : i32
    %c0_i32_1 = arith.constant 0 : i32
    return %c0_i32, %c0_i32_0 : i32, i32
  }
  func.func @transform_9(%arg0: i32) -> (i32, i32) {
    %c0_i32 = arith.constant 0 : i32
    %c0_i32_0 = arith.constant 0 : i32
    %c0_i32_1 = arith.constant 0 : i32
    return %c0_i32, %c0_i32_0 : i32, i32
  }
  func.func @transform_10(%arg0: i32) -> (i32, i32) {
    %c0_i32 = arith.constant 0 : i32
    %c0_i32_0 = arith.constant 0 : i32
    %c0_i32_1 = arith.constant 0 : i32
    return %c0_i32, %c0_i32_0 : i32, i32
  }
  func.func @transform_11(%arg0: i32) -> (i32, i32) {
    %c0_i32 = arith.constant 0 : i32
    %c0_i32_0 = arith.constant 0 : i32
    %c0_i32_1 = arith.constant 0 : i32
    return %c0_i32, %c0_i32_0 : i32, i32
  }
  func.func @transform_12(%arg0: i32) -> (i32, i32) {
    %c0_i32 = arith.constant 0 : i32
    %c0_i32_0 = arith.constant 0 : i32
    %c0_i32_1 = arith.constant 0 : i32
    return %c0_i32, %c0_i32_0 : i32, i32
  }
  func.func @transform_13(%arg0: i32) -> (i32, i32, i32) {
    %c0_i32 = arith.constant 0 : i32
    %c0_i32_0 = arith.constant 0 : i32
    %c0_i32_1 = arith.constant 0 : i32
    return %arg0, %c0_i32, %c0_i32_0 : i32, i32, i32
  }
}

</mosaic_0001>

<llo_original>
// kernel: tpu_custom_call.1
$region0: #{tpu_custom_call.1}
  #allocation0 [shape = 'u32[]', space=smem, size = 0x4, offset = 0x4, fixed_abs, tag = 'smem constant byte address 0x4 - core index']
  #allocation1 [shape = 'u32[144,128]{1,0:T(1,128)}', space=vmem, size = 0x12000, scoped, tag = 'internal scratch']
  %s0 = inlined_call_operand.vmem [shape: f32[1,32,256], index: 0, kind: input, shape index: {}]
  %s1 = inlined_call_operand.hbm [shape: bf16[3,256,256], index: 1, kind: input, shape index: {}]
  %s2 = inlined_call_operand.vmem [shape: f32[1,256], index: 2, kind: input, shape index: {}]
  %s3 = inlined_call_operand.hbm [shape: bf16[3,256,256], index: 3, kind: input, shape index: {}]
  %s4 = inlined_call_operand.vmem [shape: f32[1,256], index: 4, kind: input, shape index: {}]
  %s5 = inlined_call_operand.vmem [shape: f32[32,1], index: 5, kind: input, shape index: {}]
  %s6 = inlined_call_operand.vmem [shape: f32[32,1], index: 6, kind: input, shape index: {}]
  %s7 = inlined_call_operand.vmem [shape: f32[256,4], index: 7, kind: input, shape index: {}]
  %s8 = inlined_call_operand.vmem [shape: f32[1,4], index: 8, kind: input, shape index: {}]
  %s9 = inlined_call_operand.vmem [shape: f32[4,256], index: 9, kind: input, shape index: {}]
  %s10 = inlined_call_operand.vmem [shape: f32[1,256], index: 10, kind: input, shape index: {}]
  %s11 = inlined_call_operand.vmem [shape: f32[2,32], index: 11, kind: input, shape index: {}]
  %s12 = inlined_call_operand.vmem [shape: f32[32,2], index: 12, kind: input, shape index: {}]
  %s13 = inlined_call_operand.hbm [shape: f32[1,32,256], index: 13, kind: output, shape index: {}]
  %s14 = sld [smem:[#allocation0]]
  $region70: #{tpu_custom_call.1} parent=0
    _
  %s16 = ssub.s32 1, %s14
  %s17 = scalar_select 0, %s16, %s14
  $region1: #{tpu_custom_call.1} parent=0
    #allocation2 [shape = 'u8[393216]{0}', space=vmem, size = 0x60000, scoped, tag = 'input window, operand 1, single buffered']
    #allocation3 [shape = 's32[1]{0}', space=sflag, size = 0x4, scoped, tag = 'scoped memory for tpu_custom_call.1']
    #allocation4 [shape = 's32[1]{0}', space=sflag, size = 0x4, scoped, tag = 'scoped memory for tpu_custom_call.1']
    #allocation5 [shape = 'u8[393216]{0}', space=vmem, size = 0x60000, scoped, tag = 'input window, operand 3, single buffered']
    #allocation6 [shape = 's32[1]{0}', space=sflag, size = 0x4, scoped, tag = 'scoped memory for tpu_custom_call.1']
    #allocation7 [shape = 'u8[32768]{0}', space=vmem, size = 0x8000, scoped, tag = 'output window, operand 0, single buffered']
    %18 = vsyncpa [#allocation3], 0
    %19 = vsyncpa [#allocation6], 0
    %20 = vsyncpa [#allocation4], 0
    // Predicated region
    $region2: #{tpu_custom_call.1} parent=1 // pred_check
      _
    $region3: #{tpu_custom_call.1} parent=1 // pred_check_branch
      %22 = sbr.rel (0) target = $region5
    $region4: #{tpu_custom_call.1} parent=1 // pred_region
      _
    $region5: #{tpu_custom_call.1} parent=1 // pred_fallthru
      _
    // Predicated region
    $region6: #{tpu_custom_call.1} parent=1 // pred_check
      _
    $region7: #{tpu_custom_call.1} parent=1 // pred_check_branch
      %24 = sbr.rel (0) target = $region9
    $region8: #{tpu_custom_call.1} parent=1 // pred_region
      %s26 = ssub.s32 12288, 12288
      %27 = vsyncadd [#allocation3], %s26
      %s28 = sshll.u32 [#allocation2], 4
      %s29 = int_to_ptr.vmem [resolvable:$true] %s28
      %34 = dma.hbm_to_vmem [thread:$0]  %s1, 12288, %s29, [#allocation3], 128, 128, 8
    $region9: #{tpu_custom_call.1} parent=1 // pred_fallthru
      _
    // Predicated region
    $region10: #{tpu_custom_call.1} parent=1 // pred_check
      _
    $region11: #{tpu_custom_call.1} parent=1 // pred_check_branch
      %36 = sbr.rel (0) target = $region13
    $region12: #{tpu_custom_call.1} parent=1 // pred_region
      _
    $region13: #{tpu_custom_call.1} parent=1 // pred_fallthru
      _
    // Predicated region
    $region14: #{tpu_custom_call.1} parent=1 // pred_check
      _
    $region15: #{tpu_custom_call.1} parent=1 // pred_check_branch
      %38 = sbr.rel (0) target = $region17
    $region16: #{tpu_custom_call.1} parent=1 // pred_region
      %s40 = ssub.s32 12288, 12288
      %41 = vsyncadd [#allocation6], %s40
      %s42 = sshll.u32 [#allocation5], 4
      %s43 = int_to_ptr.vmem [resolvable:$true] %s42
      %48 = dma.hbm_to_vmem [thread:$0]  %s3, 12288, %s43, [#allocation6], 128, 128, 8
    $region17: #{tpu_custom_call.1} parent=1 // pred_fallthru
      _
    // Predicated region
    $region18: #{tpu_custom_call.1} parent=1 // pred_check
      _
    $region19: #{tpu_custom_call.1} parent=1 // pred_check_branch
      %50 = sbr.rel (0) target = $region21
    $region20: #{tpu_custom_call.1} parent=1 // pred_region
      _
    $region21: #{tpu_custom_call.1} parent=1 // pred_fallthru
      _
    // Predicated region
    $region22: #{tpu_custom_call.1} parent=1 // pred_check
      _
    $region23: #{tpu_custom_call.1} parent=1 // pred_check_branch
      %52 = sbr.rel (0) target = $region25
    $region24: #{tpu_custom_call.1} parent=1 // pred_region
      _
    $region25: #{tpu_custom_call.1} parent=1 // pred_fallthru
      _
    // Predicated region
    $region26: #{tpu_custom_call.1} parent=1 // pred_check
      _
    $region27: #{tpu_custom_call.1} parent=1 // pred_check_branch
      %54 = sbr.rel (0) target = $region29
    $region28: #{tpu_custom_call.1} parent=1 // pred_region
      _
    $region29: #{tpu_custom_call.1} parent=1 // pred_fallthru
      _
    // Predicated region
    $region30: #{tpu_custom_call.1} parent=1 // pred_check
      _
    $region31: #{tpu_custom_call.1} parent=1 // pred_check_branch
      %56 = sbr.rel (0) target = $region33
    $region32: #{tpu_custom_call.1} parent=1 // pred_region
      _
    $region33: #{tpu_custom_call.1} parent=1 // pred_fallthru
      _
    // Predicated region
    $region34: #{tpu_custom_call.1} parent=1 // pred_check
      _
    $region35: #{tpu_custom_call.1} parent=1 // pred_check_branch
      %58 = sbr.rel (0) target = $region37
    $region36: #{tpu_custom_call.1} parent=1 // pred_region
      _
    $region37: #{tpu_custom_call.1} parent=1 // pred_fallthru
      _
    // Predicated region
    $region38: #{tpu_custom_call.1} parent=1 // pred_check
      _
    $region39: #{tpu_custom_call.1} parent=1 // pred_check_branch
      %60 = sbr.rel (0) target = $region41
    $region40: #{tpu_custom_call.1} parent=1 // pred_region
      _
    $region41: #{tpu_custom_call.1} parent=1 // pred_fallthru
      _
    // Predicated region
    $region42: #{tpu_custom_call.1} parent=1 // pred_check
      _
    $region43: #{tpu_custom_call.1} parent=1 // pred_check_branch
      %62 = sbr.rel (0) target = $region45
    $region44: #{tpu_custom_call.1} parent=1 // pred_region
      _
    $region45: #{tpu_custom_call.1} parent=1 // pred_fallthru
      _
    // Predicated region
    $region46: #{tpu_custom_call.1} parent=1 // pred_check
      _
    $region47: #{tpu_custom_call.1} parent=1 // pred_check_branch
      %64 = sbr.rel (0) target = $region49
    $region48: #{tpu_custom_call.1} parent=1 // pred_region
      _
    $region49: #{tpu_custom_call.1} parent=1 // pred_fallthru
      _
    // Predicated region
    $region50: #{tpu_custom_call.1} parent=1 // pred_check
      _
    $region51: #{tpu_custom_call.1} parent=1 // pred_check_branch
      %66 = sbr.rel (0) target = $region53
    $region52: #{tpu_custom_call.1} parent=1 // pred_region
      _
    $region53: #{tpu_custom_call.1} parent=1 // pred_fallthru
      _
    // Predicated region
    $region54: #{tpu_custom_call.1} parent=1 // pred_check
      _
    $region55: #{tpu_custom_call.1} parent=1 // pred_check_branch
      %68 = sbr.rel (0) target = $region57
    $region56: #{tpu_custom_call.1} parent=1 // pred_region
      %69 = dma.done [#allocation3], 12288
    $region57: #{tpu_custom_call.1} parent=1 // pred_fallthru
      _
    // Predicated region
    $region58: #{tpu_custom_call.1} parent=1 // pred_check
      _
    $region59: #{tpu_custom_call.1} parent=1 // pred_check_branch
      %71 = sbr.rel (0) target = $region61
    $region60: #{tpu_custom_call.1} parent=1 // pred_region
      %72 = dma.done [#allocation6], 12288
    $region61: #{tpu_custom_call.1} parent=1 // pred_fallthru
      _
    %v73 = vld [vmem:[%s0] sm:$0xff]
    %v74 = vld [vmem:[%s0 + $0x8] sm:$0xff]
    %v75 = vld [vmem:[%s0 + $0x10] sm:$0xff]
    %v76 = vld [vmem:[%s0 + $0x18] sm:$0xff]
    %v77 = vld [vmem:[%s0 + $0x20] sm:$0xff]
    %v78 = vld [vmem:[%s0 + $0x28] sm:$0xff]
    %v79 = vld [vmem:[%s0 + $0x30] sm:$0xff]
    %v80 = vld [vmem:[%s0 + $0x38] sm:$0xff]
    %v81 = vrot.slane %v73, 7
    %v82 = vrot.slane %v74, 7
    %v83 = vrot.slane %v75, 7
    %v84 = vrot.slane %v76, 7
    %v85 = vrot.slane %v77, 7
    %v86 = vrot.slane %v78, 7
    %v87 = vrot.slane %v79, 7
    %v88 = vrot.slane %v80, 7
    %v89 = vlaneseq
    %v90 = vshrl.u32 %v89, 7
    %vm91 = vcmp.lt.s32.totalorder %v90, 1
    %v92 = vsel %vm91, %v85, %v87
    %v93 = vsel %vm91, %v86, %v88
    %v94 = vsel %vm91, %v83, %v85
    %v95 = vsel %vm91, %v84, %v86
    %v96 = vsel %vm91, %v81, %v83
    %v97 = vsel %vm91, %v82, %v84
    %v98 = vsel %vm91, %v87, %v81
    %v99 = vsel %vm91, %v88, %v82
    %v100 = vld [vmem:[%s5] sm:$0xff]
    %v101 = vld [vmem:[%s5 + $0x8] sm:$0xff]
    %v102 = vld [vmem:[%s5 + $0x10] sm:$0xff]
    %v103 = vld [vmem:[%s5 + $0x18] sm:$0xff]
    %105 = vset.pattern.permute.xlu0 0
    %106 = vperm.xlu0 %105, %v100
    %v107 = vpop.permute.xlu0 %106
    %110 = vset.pattern.permute.xlu0 0
    %111 = vperm.xlu0 %110, %v101
    %v112 = vpop.permute.xlu0 %111
    %115 = vset.pattern.permute.xlu0 0
    %116 = vperm.xlu0 %115, %v102
    %v117 = vpop.permute.xlu0 %116
    %120 = vset.pattern.permute.xlu0 0
    %121 = vperm.xlu0 %120, %v103
    %v122 = vpop.permute.xlu0 %121
    %v124 = vmul.f32 %v98, %v107
    %v125 = vmul.f32 %v99, %v107
    %v126 = vmul.f32 %v96, %v112
    %v127 = vmul.f32 %v97, %v112
    %v128 = vmul.f32 %v94, %v117
    %v129 = vmul.f32 %v95, %v117
    %v130 = vmul.f32 %v92, %v122
    %v131 = vmul.f32 %v93, %v122
    %v132 = vrot.slane %v73, 1
    %v133 = vrot.slane %v74, 1
    %v134 = vrot.slane %v75, 1
    %v135 = vrot.slane %v76, 1
    %v136 = vrot.slane %v77, 1
    %v137 = vrot.slane %v78, 1
    %v138 = vrot.slane %v79, 1
    %v139 = vrot.slane %v80, 1
    %vm140 = vcmp.lt.s32.totalorder %v90, 7
    %v141 = vsel %vm140, %v136, %v138
    %v142 = vsel %vm140, %v137, %v139
    %v143 = vsel %vm140, %v134, %v136
    %v144 = vsel %vm140, %v135, %v137
    %v145 = vsel %vm140, %v132, %v134
    %v146 = vsel %vm140, %v133, %v135
    %v147 = vsel %vm140, %v138, %v132
    %v148 = vsel %vm140, %v139, %v133
    %v149 = vld [vmem:[%s6] sm:$0xff]
    %v150 = vld [vmem:[%s6 + $0x8] sm:$0xff]
    %v151 = vld [vmem:[%s6 + $0x10] sm:$0xff]
    %v152 = vld [vmem:[%s6 + $0x18] sm:$0xff]
    %154 = vset.pattern.permute.xlu0 0
    %155 = vperm.xlu0 %154, %v149
    %v156 = vpop.permute.xlu0 %155
    %159 = vset.pattern.permute.xlu0 0
    %160 = vperm.xlu0 %159, %v150
    %v161 = vpop.permute.xlu0 %160
    %164 = vset.pattern.permute.xlu0 0
    %165 = vperm.xlu0 %164, %v151
    %v166 = vpop.permute.xlu0 %165
    %169 = vset.pattern.permute.xlu0 0
    %170 = vperm.xlu0 %169, %v152
    %v171 = vpop.permute.xlu0 %170
    %v173 = vmul.f32 %v145, %v156
    %v174 = vmul.f32 %v146, %v156
    %v175 = vmul.f32 %v143, %v161
    %v176 = vmul.f32 %v144, %v161
    %v177 = vmul.f32 %v141, %v166
    %v178 = vmul.f32 %v142, %v166
    %v179 = vmul.f32 %v147, %v171
    %v180 = vmul.f32 %v148, %v171
    %v181 = vpack.c.bf16 %v126, %v124
    %v182 = vpack.c.bf16 %v127, %v125
    %v183 = vpack.c.bf16 %v130, %v128
    %v184 = vpack.c.bf16 %v131, %v129
    %v185 = vld [vmem:[#allocation2] sm:$0xff]
    %v186 = vld [vmem:[#allocation2 + $0x8] sm:$0xff]
    %v187 = vld [vmem:[#allocation2 + $0x10] sm:$0xff]
    %v188 = vld [vmem:[#allocation2 + $0x18] sm:$0xff]
    %v189 = vld [vmem:[#allocation2 + $0x20] sm:$0xff]
    %v190 = vld [vmem:[#allocation2 + $0x28] sm:$0xff]
    %v191 = vld [vmem:[#allocation2 + $0x30] sm:$0xff]
    %v192 = vld [vmem:[#allocation2 + $0x38] sm:$0xff]
    %v193 = vld [vmem:[#allocation2 + $0x40] sm:$0xff]
    %v194 = vld [vmem:[#allocation2 + $0x48] sm:$0xff]
    %v195 = vld [vmem:[#allocation2 + $0x50] sm:$0xff]
    %v196 = vld [vmem:[#allocation2 + $0x58] sm:$0xff]
    %v197 = vld [vmem:[#allocation2 + $0x60] sm:$0xff]
    %v198 = vld [vmem:[#allocation2 + $0x68] sm:$0xff]
    %v199 = vld [vmem:[#allocation2 + $0x70] sm:$0xff]
    %v200 = vld [vmem:[#allocation2 + $0x78] sm:$0xff]
    %v201 = vld [vmem:[#allocation2 + $0x80] sm:$0xff]
    %v202 = vld [vmem:[#allocation2 + $0x88] sm:$0xff]
    %v203 = vld [vmem:[#allocation2 + $0x90] sm:$0xff]
    %v204 = vld [vmem:[#allocation2 + $0x98] sm:$0xff]
    %v205 = vld [vmem:[#allocation2 + $0xa0] sm:$0xff]
    %v206 = vld [vmem:[#allocation2 + $0xa8] sm:$0xff]
    %v207 = vld [vmem:[#allocation2 + $0xb0] sm:$0xff]
    %v208 = vld [vmem:[#allocation2 + $0xb8] sm:$0xff]
    %v209 = vld [vmem:[#allocation2 + $0xc0] sm:$0xff]
    %v210 = vld [vmem:[#allocation2 + $0xc8] sm:$0xff]
    %v211 = vld [vmem:[#allocation2 + $0xd0] sm:$0xff]
    %v212 = vld [vmem:[#allocation2 + $0xd8] sm:$0xff]
    %v213 = vld [vmem:[#allocation2 + $0xe0] sm:$0xff]
    %v214 = vld [vmem:[#allocation2 + $0xe8] sm:$0xff]
    %v215 = vld [vmem:[#allocation2 + $0xf0] sm:$0xff]
    %v216 = vld [vmem:[#allocation2 + $0xf8] sm:$0xff]
    %v217 = vpack.c.bf16 %v75, %v73
    %v218 = vpack.c.bf16 %v76, %v74
    %v219 = vpack.c.bf16 %v79, %v77
    %v220 = vpack.c.bf16 %v80, %v78
    %s221 = scalar_lea.vmem [#allocation2], 256
    %v222 = vld [vmem:[%s221] sm:$0xff]
    %v223 = vld [vmem:[%s221 + $0x8] sm:$0xff]
    %v224 = vld [vmem:[%s221 + $0x10] sm:$0xff]
    %v225 = vld [vmem:[%s221 + $0x18] sm:$0xff]
    %v226 = vld [vmem:[%s221 + $0x20] sm:$0xff]
    %v227 = vld [vmem:[%s221 + $0x28] sm:$0xff]
    %v228 = vld [vmem:[%s221 + $0x30] sm:$0xff]
    %v229 = vld [vmem:[%s221 + $0x38] sm:$0xff]
    %v230 = vld [vmem:[%s221 + $0x40] sm:$0xff]
    %v231 = vld [vmem:[%s221 + $0x48] sm:$0xff]
    %v232 = vld [vmem:[%s221 + $0x50] sm:$0xff]
    %v233 = vld [vmem:[%s221 + $0x58] sm:$0xff]
    %v234 = vld [vmem:[%s221 + $0x60] sm:$0xff]
    %v235 = vld [vmem:[%s221 + $0x68] sm:$0xff]
    %v236 = vld [vmem:[%s221 + $0x70] sm:$0xff]
    %v237 = vld [vmem:[%s221 + $0x78] sm:$0xff]
    %v238 = vld [vmem:[%s221 + $0x80] sm:$0xff]
    %v239 = vld [vmem:[%s221 + $0x88] sm:$0xff]
    %v240 = vld [vmem:[%s221 + $0x90] sm:$0xff]
    %v241 = vld [vmem:[%s221 + $0x98] sm:$0xff]
    %v242 = vld [vmem:[%s221 + $0xa0] sm:$0xff]
    %v243 = vld [vmem:[%s221 + $0xa8] sm:$0xff]
    %v244 = vld [vmem:[%s221 + $0xb0] sm:$0xff]
    %v245 = vld [vmem:[%s221 + $0xb8] sm:$0xff]
    %v246 = vld [vmem:[%s221 + $0xc0] sm:$0xff]
    %v247 = vld [vmem:[%s221 + $0xc8] sm:$0xff]
    %v248 = vld [vmem:[%s221 + $0xd0] sm:$0xff]
    %v249 = vld [vmem:[%s221 + $0xd8] sm:$0xff]
    %v250 = vld [vmem:[%s221 + $0xe0] sm:$0xff]
    %v251 = vld [vmem:[%s221 + $0xe8] sm:$0xff]
    %v252 = vld [vmem:[%s221 + $0xf0] sm:$0xff]
    %v253 = vld [vmem:[%s221 + $0xf8] sm:$0xff]
    %v286 = vunpack.c.l.b16 %v222
    %v287 = vunpack.c.h.b16 %v222
    %v288 = vunpack.c.l.b16 %v223
    %v289 = vunpack.c.h.b16 %v223
    %v290 = vunpack.c.l.b16 %v224
    %v291 = vunpack.c.h.b16 %v224
    %v292 = vunpack.c.l.b16 %v225
    %v293 = vunpack.c.h.b16 %v225
    %v294 = vunpack.c.l.b16 %v226
    %v295 = vunpack.c.h.b16 %v226
    %v296 = vunpack.c.l.b16 %v227
    %v297 = vunpack.c.h.b16 %v227
    %v298 = vunpack.c.l.b16 %v228
    %v299 = vunpack.c.h.b16 %v228
    %v300 = vunpack.c.l.b16 %v229
    %v301 = vunpack.c.h.b16 %v229
    %v302 = vunpack.c.l.b16 %v230
    %v303 = vunpack.c.h.b16 %v230
    %v304 = vunpack.c.l.b16 %v231
    %v305 = vunpack.c.h.b16 %v231
    %v306 = vunpack.c.l.b16 %v232
    %v307 = vunpack.c.h.b16 %v232
    %v308 = vunpack.c.l.b16 %v233
    %v309 = vunpack.c.h.b16 %v233
    %v310 = vunpack.c.l.b16 %v234
    %v311 = vunpack.c.h.b16 %v234
    %v312 = vunpack.c.l.b16 %v235
    %v313 = vunpack.c.h.b16 %v235
    %v314 = vunpack.c.l.b16 %v236
    %v315 = vunpack.c.h.b16 %v236
    %v316 = vunpack.c.l.b16 %v237
    %v317 = vunpack.c.h.b16 %v237
    %v318 = vunpack.c.l.b16 %v238
    %v319 = vunpack.c.h.b16 %v238
    %v320 = vunpack.c.l.b16 %v239
    %v321 = vunpack.c.h.b16 %v239
    %v322 = vunpack.c.l.b16 %v240
    %v323 = vunpack.c.h.b16 %v240
    %v324 = vunpack.c.l.b16 %v241
    %v325 = vunpack.c.h.b16 %v241
    %v326 = vunpack.c.l.b16 %v242
    %v327 = vunpack.c.h.b16 %v242
    %v328 = vunpack.c.l.b16 %v243
    %v329 = vunpack.c.h.b16 %v243
    %v330 = vunpack.c.l.b16 %v244
    %v331 = vunpack.c.h.b16 %v244
    %v332 = vunpack.c.l.b16 %v245
    %v333 = vunpack.c.h.b16 %v245
    %v334 = vunpack.c.l.b16 %v246
    %v335 = vunpack.c.h.b16 %v246
    %v336 = vunpack.c.l.b16 %v247
    %v337 = vunpack.c.h.b16 %v247
    %v338 = vunpack.c.l.b16 %v248
    %v339 = vunpack.c.h.b16 %v248
    %v340 = vunpack.c.l.b16 %v249
    %v341 = vunpack.c.h.b16 %v249
    %v342 = vunpack.c.l.b16 %v250
    %v343 = vunpack.c.h.b16 %v250
    %v344 = vunpack.c.l.b16 %v251
    %v345 = vunpack.c.h.b16 %v251
    %v346 = vunpack.c.l.b16 %v252
    %v347 = vunpack.c.h.b16 %v252
    %v348 = vunpack.c.l.b16 %v253
    %v349 = vunpack.c.h.b16 %v253
    %v350 = vpack.c.b16 %v288, %v286
    %v351 = vpack.c.b16 %v289, %v287
    %v352 = vpack.c.b16 %v292, %v290
    %v353 = vpack.c.b16 %v293, %v291
    %v354 = vpack.c.b16 %v296, %v294
    %v355 = vpack.c.b16 %v297, %v295
    %v356 = vpack.c.b16 %v300, %v298
    %v357 = vpack.c.b16 %v301, %v299
    %v358 = vpack.c.b16 %v304, %v302
    %v359 = vpack.c.b16 %v305, %v303
    %v360 = vpack.c.b16 %v308, %v306
    %v361 = vpack.c.b16 %v309, %v307
    %v362 = vpack.c.b16 %v312, %v310
    %v363 = vpack.c.b16 %v313, %v311
    %v364 = vpack.c.b16 %v316, %v314
    %v365 = vpack.c.b16 %v317, %v315
    %v366 = vpack.c.b16 %v320, %v318
    %v367 = vpack.c.b16 %v321, %v319
    %v368 = vpack.c.b16 %v324, %v322
    %v369 = vpack.c.b16 %v325, %v323
    %v370 = vpack.c.b16 %v328, %v326
    %v371 = vpack.c.b16 %v329, %v327
    %v372 = vpack.c.b16 %v332, %v330
    %v373 = vpack.c.b16 %v333, %v331
    %v374 = vpack.c.b16 %v336, %v334
    %v375 = vpack.c.b16 %v337, %v335
    %v376 = vpack.c.b16 %v340, %v338
    %v377 = vpack.c.b16 %v341, %v339
    %v378 = vpack.c.b16 %v344, %v342
    %v379 = vpack.c.b16 %v345, %v343
    %v380 = vpack.c.b16 %v348, %v346
    %v381 = vpack.c.b16 %v349, %v347
    %414 = vmatprep.subr.bf16.mxu0 %v351
    %415 = vmatpush1.bf16.msra.mxu0 %v350
    %416 = vmatprep.subr.bf16.mxu0 %v353
    %417 = vmatpush1.bf16.msra.mxu0 %v352
    %418 = vmatprep.subr.bf16.mxu0 %v355
    %419 = vmatpush1.bf16.msra.mxu0 %v354
    %420 = vmatprep.subr.bf16.mxu0 %v357
    %421 = vmatpush1.bf16.msra.mxu0 %v356
    %422 = vmatprep.subr.bf16.mxu0 %v359
    %423 = vmatpush1.bf16.msra.mxu0 %v358
    %424 = vmatprep.subr.bf16.mxu0 %v361
    %425 = vmatpush1.bf16.msra.mxu0 %v360
    %426 = vmatprep.subr.bf16.mxu0 %v363
    %427 = vmatpush1.bf16.msra.mxu0 %v362
    %428 = vmatprep.subr.bf16.mxu0 %v365
    %429 = vmatpush1.bf16.msra.mxu0 %v364
    %430 = vmatprep.subr.bf16.mxu0 %v367
    %431 = vmatpush1.bf16.msra.mxu0 %v366
    %432 = vmatprep.subr.bf16.mxu0 %v369
    %433 = vmatpush1.bf16.msra.mxu0 %v368
    %434 = vmatprep.subr.bf16.mxu0 %v371
    %435 = vmatpush1.bf16.msra.mxu0 %v370
    %436 = vmatprep.subr.bf16.mxu0 %v373
    %437 = vmatpush1.bf16.msra.mxu0 %v372
    %438 = vmatprep.subr.bf16.mxu0 %v375
    %439 = vmatpush1.bf16.msra.mxu0 %v374
    %440 = vmatprep.subr.bf16.mxu0 %v377
    %441 = vmatpush1.bf16.msra.mxu0 %v376
    %442 = vmatprep.subr.bf16.mxu0 %v379
    %443 = vmatpush1.bf16.msra.mxu0 %v378
    %444 = vmatprep.subr.bf16.mxu0 %v381
    %445 = vmatpush1.bf16.msra.mxu0 %v380
    %446 = vmatprep.mubr.bf16.mxu0 %v218
    %447 = vmatmul.mubr.bf16.gmra.mrb[0].mxu0 %v217
    %v448 = vpop.f32.mrb[0].mxu0
    %v449 = vadd.f32 0.0, %v448
    %v450 = vpop.f32.mrb[0].mxu0
    %v451 = vadd.f32 0.0, %v450
    %v452 = vpop.f32.mrb[0].mxu0
    %v453 = vadd.f32 0.0, %v452
    %v454 = vpop.f32.mrb[0].mxu0
    %v455 = vadd.f32 0.0, %v454
    %456 = vmatprep.mubr.bf16.mxu0 %v220
    %457 = vmatmul.mubr.bf16.gmra.mrb[0].mxu0 %v219
    %v458 = vpop.f32.mrb[0].mxu0
    %v459 = vadd.f32 0.0, %v458
    %v460 = vpop.f32.mrb[0].mxu0
    %v461 = vadd.f32 0.0, %v460
    %v462 = vpop.f32.mrb[0].mxu0
    %v463 = vadd.f32 0.0, %v462
    %v464 = vpop.f32.mrb[0].mxu0
    %v465 = vadd.f32 0.0, %v464
    %466 = vdwg.mxu0
    %v499 = vunpack.c.l.b16 %v185
    %v500 = vunpack.c.h.b16 %v185
    %v501 = vunpack.c.l.b16 %v186
    %v502 = vunpack.c.h.b16 %v186
    %v503 = vunpack.c.l.b16 %v187
    %v504 = vunpack.c.h.b16 %v187
    %v505 = vunpack.c.l.b16 %v188
    %v506 = vunpack.c.h.b16 %v188
    %v507 = vunpack.c.l.b16 %v189
    %v508 = vunpack.c.h.b16 %v189
    %v509 = vunpack.c.l.b16 %v190
    %v510 = vunpack.c.h.b16 %v190
    %v511 = vunpack.c.l.b16 %v191
    %v512 = vunpack.c.h.b16 %v191
    %v513 = vunpack.c.l.b16 %v192
    %v514 = vunpack.c.h.b16 %v192
    %v515 = vunpack.c.l.b16 %v193
    %v516 = vunpack.c.h.b16 %v193
    %v517 = vunpack.c.l.b16 %v194
    %v518 = vunpack.c.h.b16 %v194
    %v519 = vunpack.c.l.b16 %v195
    %v520 = vunpack.c.h.b16 %v195
    %v521 = vunpack.c.l.b16 %v196
    %v522 = vunpack.c.h.b16 %v196
    %v523 = vunpack.c.l.b16 %v197
    %v524 = vunpack.c.h.b16 %v197
    %v525 = vunpack.c.l.b16 %v198
    %v526 = vunpack.c.h.b16 %v198
    %v527 = vunpack.c.l.b16 %v199
    %v528 = vunpack.c.h.b16 %v199
    %v529 = vunpack.c.l.b16 %v200
    %v530 = vunpack.c.h.b16 %v200
    %v531 = vunpack.c.l.b16 %v201
    %v532 = vunpack.c.h.b16 %v201
    %v533 = vunpack.c.l.b16 %v202
    %v534 = vunpack.c.h.b16 %v202
    %v535 = vunpack.c.l.b16 %v203
    %v536 = vunpack.c.h.b16 %v203
    %v537 = vunpack.c.l.b16 %v204
    %v538 = vunpack.c.h.b16 %v204
    %v539 = vunpack.c.l.b16 %v205
    %v540 = vunpack.c.h.b16 %v205
    %v541 = vunpack.c.l.b16 %v206
    %v542 = vunpack.c.h.b16 %v206
    %v543 = vunpack.c.l.b16 %v207
    %v544 = vunpack.c.h.b16 %v207
    %v545 = vunpack.c.l.b16 %v208
    %v546 = vunpack.c.h.b16 %v208
    %v547 = vunpack.c.l.b16 %v209
    %v548 = vunpack.c.h.b16 %v209
    %v549 = vunpack.c.l.b16 %v210
    %v550 = vunpack.c.h.b16 %v210
    %v551 = vunpack.c.l.b16 %v211
    %v552 = vunpack.c.h.b16 %v211
    %v553 = vunpack.c.l.b16 %v212
    %v554 = vunpack.c.h.b16 %v212
    %v555 = vunpack.c.l.b16 %v213
    %v556 = vunpack.c.h.b16 %v213
    %v557 = vunpack.c.l.b16 %v214
    %v558 = vunpack.c.h.b16 %v214
    %v559 = vunpack.c.l.b16 %v215
    %v560 = vunpack.c.h.b16 %v215
    %v561 = vunpack.c.l.b16 %v216
    %v562 = vunpack.c.h.b16 %v216
    %v563 = vpack.c.b16 %v501, %v499
    %v564 = vpack.c.b16 %v502, %v500
    %v565 = vpack.c.b16 %v505, %v503
    %v566 = vpack.c.b16 %v506, %v504
    %v567 = vpack.c.b16 %v509, %v507
    %v568 = vpack.c.b16 %v510, %v508
    %v569 = vpack.c.b16 %v513, %v511
    %v570 = vpack.c.b16 %v514, %v512
    %v571 = vpack.c.b16 %v517, %v515
    %v572 = vpack.c.b16 %v518, %v516
    %v573 = vpack.c.b16 %v521, %v519
    %v574 = vpack.c.b16 %v522, %v520
    %v575 = vpack.c.b16 %v525, %v523
    %v576 = vpack.c.b16 %v526, %v524
    %v577 = vpack.c.b16 %v529, %v527
    %v578 = vpack.c.b16 %v530, %v528
    %v579 = vpack.c.b16 %v533, %v531
    %v580 = vpack.c.b16 %v534, %v532
    %v581 = vpack.c.b16 %v537, %v535
    %v582 = vpack.c.b16 %v538, %v536
    %v583 = vpack.c.b16 %v541, %v539
    %v584 = vpack.c.b16 %v542, %v540
    %v585 = vpack.c.b16 %v545, %v543
    %v586 = vpack.c.b16 %v546, %v544
    %v587 = vpack.c.b16 %v549, %v547
    %v588 = vpack.c.b16 %v550, %v548
    %v589 = vpack.c.b16 %v553, %v551
    %v590 = vpack.c.b16 %v554, %v552
    %v591 = vpack.c.b16 %v557, %v555
    %v592 = vpack.c.b16 %v558, %v556
    %v593 = vpack.c.b16 %v561, %v559
    %v594 = vpack.c.b16 %v562, %v560
    %627 = vmatprep.subr.bf16.mxu0 %v564
    %628 = vmatpush1.bf16.msra.mxu0 %v563
    %629 = vmatprep.subr.bf16.mxu0 %v566
    %630 = vmatpush1.bf16.msra.mxu0 %v565
    %631 = vmatprep.subr.bf16.mxu0 %v568
    %632 = vmatpush1.bf16.msra.mxu0 %v567
    %633 = vmatprep.subr.bf16.mxu0 %v570
    %634 = vmatpush1.bf16.msra.mxu0 %v569
    %635 = vmatprep.subr.bf16.mxu0 %v572
    %636 = vmatpush1.bf16.msra.mxu0 %v571
    %637 = vmatprep.subr.bf16.mxu0 %v574
    %638 = vmatpush1.bf16.msra.mxu0 %v573
    %639 = vmatprep.subr.bf16.mxu0 %v576
    %640 = vmatpush1.bf16.msra.mxu0 %v575
    %641 = vmatprep.subr.bf16.mxu0 %v578
    %642 = vmatpush1.bf16.msra.mxu0 %v577
    %643 = vmatprep.subr.bf16.mxu0 %v580
    %644 = vmatpush1.bf16.msra.mxu0 %v579
    %645 = vmatprep.subr.bf16.mxu0 %v582
    %646 = vmatpush1.bf16.msra.mxu0 %v581
    %647 = vmatprep.subr.bf16.mxu0 %v584
    %648 = vmatpush1.bf16.msra.mxu0 %v583
    %649 = vmatprep.subr.bf16.mxu0 %v586
    %650 = vmatpush1.bf16.msra.mxu0 %v585
    %651 = vmatprep.subr.bf16.mxu0 %v588
    %652 = vmatpush1.bf16.msra.mxu0 %v587
    %653 = vmatprep.subr.bf16.mxu0 %v590
    %654 = vmatpush1.bf16.msra.mxu0 %v589
    %655 = vmatprep.subr.bf16.mxu0 %v592
    %656 = vmatpush1.bf16.msra.mxu0 %v591
    %657 = vmatprep.subr.bf16.mxu0 %v594
    %658 = vmatpush1.bf16.msra.mxu0 %v593
    %659 = vmatprep.mubr.bf16.mxu0 %v182
    %660 = vmatmul.mubr.bf16.gmra.mrb[0].mxu0 %v181
    %v661 = vpop.f32.mrb[0].mxu0
    %v662 = vadd.f32 %v449, %v661
    %v663 = vpop.f32.mrb[0].mxu0
    %v664 = vadd.f32 %v451, %v663
    %v665 = vpop.f32.mrb[0].mxu0
    %v666 = vadd.f32 %v453, %v665
    %v667 = vpop.f32.mrb[0].mxu0
    %v668 = vadd.f32 %v455, %v667
    %669 = vmatprep.mubr.bf16.mxu0 %v184
    %670 = vmatmul.mubr.bf16.gmra.mrb[0].mxu0 %v183
    %v671 = vpop.f32.mrb[0].mxu0
    %v672 = vadd.f32 %v459, %v671
    %v673 = vpop.f32.mrb[0].mxu0
    %v674 = vadd.f32 %v461, %v673
    %v675 = vpop.f32.mrb[0].mxu0
    %v676 = vadd.f32 %v463, %v675
    %v677 = vpop.f32.mrb[0].mxu0
    %v678 = vadd.f32 %v465, %v677
    %679 = vdwg.mxu0
    %v680 = vpack.c.bf16 %v175, %v173
    %v681 = vpack.c.bf16 %v176, %v174
    %v682 = vpack.c.bf16 %v179, %v177
    %v683 = vpack.c.bf16 %v180, %v178
    %s684 = scalar_lea.vmem [#allocation2], 512
    %v685 = vld [vmem:[%s684] sm:$0xff]
    %v686 = vld [vmem:[%s684 + $0x8] sm:$0xff]
    %v687 = vld [vmem:[%s684 + $0x10] sm:$0xff]
    %v688 = vld [vmem:[%s684 + $0x18] sm:$0xff]
    %v689 = vld [vmem:[%s684 + $0x20] sm:$0xff]
    %v690 = vld [vmem:[%s684 + $0x28] sm:$0xff]
    %v691 = vld [vmem:[%s684 + $0x30] sm:$0xff]
    %v692 = vld [vmem:[%s684 + $0x38] sm:$0xff]
    %v693 = vld [vmem:[%s684 + $0x40] sm:$0xff]
    %v694 = vld [vmem:[%s684 + $0x48] sm:$0xff]
    %v695 = vld [vmem:[%s684 + $0x50] sm:$0xff]
    %v696 = vld [vmem:[%s684 + $0x58] sm:$0xff]
    %v697 = vld [vmem:[%s684 + $0x60] sm:$0xff]
    %v698 = vld [vmem:[%s684 + $0x68] sm:$0xff]
    %v699 = vld [vmem:[%s684 + $0x70] sm:$0xff]
    %v700 = vld [vmem:[%s684 + $0x78] sm:$0xff]
    %v701 = vld [vmem:[%s684 + $0x80] sm:$0xff]
    %v702 = vld [vmem:[%s684 + $0x88] sm:$0xff]
    %v703 = vld [vmem:[%s684 + $0x90] sm:$0xff]
    %v704 = vld [vmem:[%s684 + $0x98] sm:$0xff]
    %v705 = vld [vmem:[%s684 + $0xa0] sm:$0xff]
    %v706 = vld [vmem:[%s684 + $0xa8] sm:$0xff]
    %v707 = vld [vmem:[%s684 + $0xb0] sm:$0xff]
    %v708 = vld [vmem:[%s684 + $0xb8] sm:$0xff]
    %v709 = vld [vmem:[%s684 + $0xc0] sm:$0xff]
    %v710 = vld [vmem:[%s684 + $0xc8] sm:$0xff]
    %v711 = vld [vmem:[%s684 + $0xd0] sm:$0xff]
    %v712 = vld [vmem:[%s684 + $0xd8] sm:$0xff]
    %v713 = vld [vmem:[%s684 + $0xe0] sm:$0xff]
    %v714 = vld [vmem:[%s684 + $0xe8] sm:$0xff]
    %v715 = vld [vmem:[%s684 + $0xf0] sm:$0xff]
    %v716 = vld [vmem:[%s684 + $0xf8] sm:$0xff]
    %v749 = vunpack.c.l.b16 %v685
    %v750 = vunpack.c.h.b16 %v685
    %v751 = vunpack.c.l.b16 %v686
    %v752 = vunpack.c.h.b16 %v686
    %v753 = vunpack.c.l.b16 %v687
    %v754 = vunpack.c.h.b16 %v687
    %v755 = vunpack.c.l.b16 %v688
    %v756 = vunpack.c.h.b16 %v688
    %v757 = vunpack.c.l.b16 %v689
    %v758 = vunpack.c.h.b16 %v689
    %v759 = vunpack.c.l.b16 %v690
    %v760 = vunpack.c.h.b16 %v690
    %v761 = vunpack.c.l.b16 %v691
    %v762 = vunpack.c.h.b16 %v691
    %v763 = vunpack.c.l.b16 %v692
    %v764 = vunpack.c.h.b16 %v692
    %v765 = vunpack.c.l.b16 %v693
    %v766 = vunpack.c.h.b16 %v693
    %v767 = vunpack.c.l.b16 %v694
    %v768 = vunpack.c.h.b16 %v694
    %v769 = vunpack.c.l.b16 %v695
    %v770 = vunpack.c.h.b16 %v695
    %v771 = vunpack.c.l.b16 %v696
    %v772 = vunpack.c.h.b16 %v696
    %v773 = vunpack.c.l.b16 %v697
    %v774 = vunpack.c.h.b16 %v697
    %v775 = vunpack.c.l.b16 %v698
    %v776 = vunpack.c.h.b16 %v698
    %v777 = vunpack.c.l.b16 %v699
    %v778 = vunpack.c.h.b16 %v699
    %v779 = vunpack.c.l.b16 %v700
    %v780 = vunpack.c.h.b16 %v700
    %v781 = vunpack.c.l.b16 %v701
    %v782 = vunpack.c.h.b16 %v701
    %v783 = vunpack.c.l.b16 %v702
    %v784 = vunpack.c.h.b16 %v702
    %v785 = vunpack.c.l.b16 %v703
    %v786 = vunpack.c.h.b16 %v703
    %v787 = vunpack.c.l.b16 %v704
    %v788 = vunpack.c.h.b16 %v704
    %v789 = vunpack.c.l.b16 %v705
    %v790 = vunpack.c.h.b16 %v705
    %v791 = vunpack.c.l.b16 %v706
    %v792 = vunpack.c.h.b16 %v706
    %v793 = vunpack.c.l.b16 %v707
    %v794 = vunpack.c.h.b16 %v707
    %v795 = vunpack.c.l.b16 %v708
    %v796 = vunpack.c.h.b16 %v708
    %v797 = vunpack.c.l.b16 %v709
    %v798 = vunpack.c.h.b16 %v709
    %v799 = vunpack.c.l.b16 %v710
    %v800 = vunpack.c.h.b16 %v710
    %v801 = vunpack.c.l.b16 %v711
    %v802 = vunpack.c.h.b16 %v711
    %v803 = vunpack.c.l.b16 %v712
    %v804 = vunpack.c.h.b16 %v712
    %v805 = vunpack.c.l.b16 %v713
    %v806 = vunpack.c.h.b16 %v713
    %v807 = vunpack.c.l.b16 %v714
    %v808 = vunpack.c.h.b16 %v714
    %v809 = vunpack.c.l.b16 %v715
    %v810 = vunpack.c.h.b16 %v715
    %v811 = vunpack.c.l.b16 %v716
    %v812 = vunpack.c.h.b16 %v716
    %v813 = vpack.c.b16 %v751, %v749
    %v814 = vpack.c.b16 %v752, %v750
    %v815 = vpack.c.b16 %v755, %v753
    %v816 = vpack.c.b16 %v756, %v754
    %v817 = vpack.c.b16 %v759, %v757
    %v818 = vpack.c.b16 %v760, %v758
    %v819 = vpack.c.b16 %v763, %v761
    %v820 = vpack.c.b16 %v764, %v762
    %v821 = vpack.c.b16 %v767, %v765
    %v822 = vpack.c.b16 %v768, %v766
    %v823 = vpack.c.b16 %v771, %v769
    %v824 = vpack.c.b16 %v772, %v770
    %v825 = vpack.c.b16 %v775, %v773
    %v826 = vpack.c.b16 %v776, %v774
    %v827 = vpack.c.b16 %v779, %v777
    %v828 = vpack.c.b16 %v780, %v778
    %v829 = vpack.c.b16 %v783, %v781
    %v830 = vpack.c.b16 %v784, %v782
    %v831 = vpack.c.b16 %v787, %v785
    %v832 = vpack.c.b16 %v788, %v786
    %v833 = vpack.c.b16 %v791, %v789
    %v834 = vpack.c.b16 %v792, %v790
    %v835 = vpack.c.b16 %v795, %v793
    %v836 = vpack.c.b16 %v796, %v794
    %v837 = vpack.c.b16 %v799, %v797
    %v838 = vpack.c.b16 %v800, %v798
    %v839 = vpack.c.b16 %v803, %v801
    %v840 = vpack.c.b16 %v804, %v802
    %v841 = vpack.c.b16 %v807, %v805
    %v842 = vpack.c.b16 %v808, %v806
    %v843 = vpack.c.b16 %v811, %v809
    %v844 = vpack.c.b16 %v812, %v810
    %877 = vmatprep.subr.bf16.mxu0 %v814
    %878 = vmatpush1.bf16.msra.mxu0 %v813
    %879 = vmatprep.subr.bf16.mxu0 %v816
    %880 = vmatpush1.bf16.msra.mxu0 %v815
    %881 = vmatprep.subr.bf16.mxu0 %v818
    %882 = vmatpush1.bf16.msra.mxu0 %v817
    %883 = vmatprep.subr.bf16.mxu0 %v820
    %884 = vmatpush1.bf16.msra.mxu0 %v819
    %885 = vmatprep.subr.bf16.mxu0 %v822
    %886 = vmatpush1.bf16.msra.mxu0 %v821
    %887 = vmatprep.subr.bf16.mxu0 %v824
    %888 = vmatpush1.bf16.msra.mxu0 %v823
    %889 = vmatprep.subr.bf16.mxu0 %v826
    %890 = vmatpush1.bf16.msra.mxu0 %v825
    %891 = vmatprep.subr.bf16.mxu0 %v828
    %892 = vmatpush1.bf16.msra.mxu0 %v827
    %893 = vmatprep.subr.bf16.mxu0 %v830
    %894 = vmatpush1.bf16.msra.mxu0 %v829
    %895 = vmatprep.subr.bf16.mxu0 %v832
    %896 = vmatpush1.bf16.msra.mxu0 %v831
    %897 = vmatprep.subr.bf16.mxu0 %v834
    %898 = vmatpush1.bf16.msra.mxu0 %v833
    %899 = vmatprep.subr.bf16.mxu0 %v836
    %900 = vmatpush1.bf16.msra.mxu0 %v835
    %901 = vmatprep.subr.bf16.mxu0 %v838
    %902 = vmatpush1.bf16.msra.mxu0 %v837
    %903 = vmatprep.subr.bf16.mxu0 %v840
    %904 = vmatpush1.bf16.msra.mxu0 %v839
    %905 = vmatprep.subr.bf16.mxu0 %v842
    %906 = vmatpush1.bf16.msra.mxu0 %v841
    %907 = vmatprep.subr.bf16.mxu0 %v844
    %908 = vmatpush1.bf16.msra.mxu0 %v843
    %909 = vmatprep.mubr.bf16.mxu0 %v681
    %910 = vmatmul.mubr.bf16.gmra.mrb[0].mxu0 %v680
    %v911 = vpop.f32.mrb[0].mxu0
    %v912 = vadd.f32 0.0, %v911
    %v913 = vpop.f32.mrb[0].mxu0
    %v914 = vadd.f32 0.0, %v913
    %v915 = vpop.f32.mrb[0].mxu0
    %v916 = vadd.f32 0.0, %v915
    %v917 = vpop.f32.mrb[0].mxu0
    %v918 = vadd.f32 0.0, %v917
    %919 = vmatprep.mubr.bf16.mxu0 %v683
    %920 = vmatmul.mubr.bf16.gmra.mrb[0].mxu0 %v682
    %v921 = vpop.f32.mrb[0].mxu0
    %v922 = vadd.f32 0.0, %v921
    %v923 = vpop.f32.mrb[0].mxu0
    %v924 = vadd.f32 0.0, %v923
    %v925 = vpop.f32.mrb[0].mxu0
    %v926 = vadd.f32 0.0, %v925
    %v927 = vpop.f32.mrb[0].mxu0
    %v928 = vadd.f32 0.0, %v927
    %929 = vdwg.mxu0
    %v930 = vadd.f32 %v662, %v912
    %v931 = vadd.f32 %v664, %v914
    %v932 = vadd.f32 %v666, %v916
    %v933 = vadd.f32 %v668, %v918
    %v934 = vadd.f32 %v672, %v922
    %v935 = vadd.f32 %v674, %v924
    %v936 = vadd.f32 %v676, %v926
    %v937 = vadd.f32 %v678, %v928
    %v938 = vld [vmem:[%s2] sm:$0x3]
    %v940 = vlaneseq
    %v941 = vshrl.u32 %v940, 7
    %v942 = vsub.s32 0, %v941
    %v943 = vrot.slane %v938, %v942
    %v944 = vlaneseq
    %v945 = vshrl.u32 %v944, 7
    %v946 = vsub.s32 1, %v945
    %v947 = vrot.slane %v938, %v946
    %v950 = vadd.f32 %v930, %v943
    %v951 = vadd.f32 %v931, %v947
    %v952 = vadd.f32 %v932, %v943
    %v953 = vadd.f32 %v933, %v947
    %v954 = vadd.f32 %v934, %v943
    %v955 = vadd.f32 %v935, %v947
    %v956 = vadd.f32 %v936, %v943
    %v957 = vadd.f32 %v937, %v947
    %v958 = vmax.f32 %v950, 0.0
    %v959 = vmax.f32 %v951, 0.0
    %v960 = vmax.f32 %v952, 0.0
    %v961 = vmax.f32 %v953, 0.0
    %v962 = vmax.f32 %v954, 0.0
    %v963 = vmax.f32 %v955, 0.0
    %v964 = vmax.f32 %v956, 0.0
    %v965 = vmax.f32 %v957, 0.0
    %v966 = vrot.slane %v958, 7
    %v967 = vrot.slane %v959, 7
    %v968 = vrot.slane %v960, 7
    %v969 = vrot.slane %v961, 7
    %v970 = vrot.slane %v962, 7
    %v971 = vrot.slane %v963, 7
    %v972 = vrot.slane %v964, 7
    %v973 = vrot.slane %v965, 7
    %v974 = vsel %vm91, %v970, %v972
    %v975 = vsel %vm91, %v971, %v973
    %v976 = vsel %vm91, %v968, %v970
    %v977 = vsel %vm91, %v969, %v971
    %v978 = vsel %vm91, %v966, %v968
    %v979 = vsel %vm91, %v967, %v969
    %v980 = vsel %vm91, %v972, %v966
    %v981 = vsel %vm91, %v973, %v967
    %v982 = vmul.f32 %v980, %v107
    %v983 = vmul.f32 %v981, %v107
    %v984 = vmul.f32 %v978, %v112
    %v985 = vmul.f32 %v979, %v112
    %v986 = vmul.f32 %v976, %v117
    %v987 = vmul.f32 %v977, %v117
    %v988 = vmul.f32 %v974, %v122
    %v989 = vmul.f32 %v975, %v122
    %v990 = vrot.slane %v958, 1
    %v991 = vrot.slane %v959, 1
    %v992 = vrot.slane %v960, 1
    %v993 = vrot.slane %v961, 1
    %v994 = vrot.slane %v962, 1
    %v995 = vrot.slane %v963, 1
    %v996 = vrot.slane %v964, 1
    %v997 = vrot.slane %v965, 1
    %v998 = vsel %vm140, %v994, %v996
    %v999 = vsel %vm140, %v995, %v997
    %v1000 = vsel %vm140, %v992, %v994
    %v1001 = vsel %vm140, %v993, %v995
    %v1002 = vsel %vm140, %v990, %v992
    %v1003 = vsel %vm140, %v991, %v993
    %v1004 = vsel %vm140, %v996, %v990
    %v1005 = vsel %vm140, %v997, %v991
    %v1006 = vmul.f32 %v1002, %v156
    %v1007 = vmul.f32 %v1003, %v156
    %v1008 = vmul.f32 %v1000, %v161
    %v1009 = vmul.f32 %v1001, %v161
    %v1010 = vmul.f32 %v998, %v166
    %v1011 = vmul.f32 %v999, %v166
    %v1012 = vmul.f32 %v1004, %v171
    %v1013 = vmul.f32 %v1005, %v171
    %v1014 = vpack.c.bf16 %v984, %v982
    %v1015 = vpack.c.bf16 %v985, %v983
    %v1016 = vpack.c.bf16 %v988, %v986
    %v1017 = vpack.c.bf16 %v989, %v987
    %v1018 = vld [vmem:[#allocation5] sm:$0xff]
    %v1019 = vld [vmem:[#allocation5 + $0x8] sm:$0xff]
    %v1020 = vld [vmem:[#allocation5 + $0x10] sm:$0xff]
    %v1021 = vld [vmem:[#allocation5 + $0x18] sm:$0xff]
    %v1022 = vld [vmem:[#allocation5 + $0x20] sm:$0xff]
    %v1023 = vld [vmem:[#allocation5 + $0x28] sm:$0xff]
    %v1024 = vld [vmem:[#allocation5 + $0x30] sm:$0xff]
    %v1025 = vld [vmem:[#allocation5 + $0x38] sm:$0xff]
    %v1026 = vld [vmem:[#allocation5 + $0x40] sm:$0xff]
    %v1027 = vld [vmem:[#allocation5 + $0x48] sm:$0xff]
    %v1028 = vld [vmem:[#allocation5 + $0x50] sm:$0xff]
    %v1029 = vld [vmem:[#allocation5 + $0x58] sm:$0xff]
    %v1030 = vld [vmem:[#allocation5 + $0x60] sm:$0xff]
    %v1031 = vld [vmem:[#allocation5 + $0x68] sm:$0xff]
    %v1032 = vld [vmem:[#allocation5 + $0x70] sm:$0xff]
    %v1033 = vld [vmem:[#allocation5 + $0x78] sm:$0xff]
    %v1034 = vld [vmem:[#allocation5 + $0x80] sm:$0xff]
    %v1035 = vld [vmem:[#allocation5 + $0x88] sm:$0xff]
    %v1036 = vld [vmem:[#allocation5 + $0x90] sm:$0xff]
    %v1037 = vld [vmem:[#allocation5 + $0x98] sm:$0xff]
    %v1038 = vld [vmem:[#allocation5 + $0xa0] sm:$0xff]
    %v1039 = vld [vmem:[#allocation5 + $0xa8] sm:$0xff]
    %v1040 = vld [vmem:[#allocation5 + $0xb0] sm:$0xff]
    %v1041 = vld [vmem:[#allocation5 + $0xb8] sm:$0xff]
    %v1042 = vld [vmem:[#allocation5 + $0xc0] sm:$0xff]
    %v1043 = vld [vmem:[#allocation5 + $0xc8] sm:$0xff]
    %v1044 = vld [vmem:[#allocation5 + $0xd0] sm:$0xff]
    %v1045 = vld [vmem:[#allocation5 + $0xd8] sm:$0xff]
    %v1046 = vld [vmem:[#allocation5 + $0xe0] sm:$0xff]
    %v1047 = vld [vmem:[#allocation5 + $0xe8] sm:$0xff]
    %v1048 = vld [vmem:[#allocation5 + $0xf0] sm:$0xff]
    %v1049 = vld [vmem:[#allocation5 + $0xf8] sm:$0xff]
    %v1050 = vpack.c.bf16 %v960, %v958
    %v1051 = vpack.c.bf16 %v961, %v959
    %v1052 = vpack.c.bf16 %v964, %v962
    %v1053 = vpack.c.bf16 %v965, %v963
    %s1054 = scalar_lea.vmem [#allocation5], 256
    %v1055 = vld [vmem:[%s1054] sm:$0xff]
    %v1056 = vld [vmem:[%s1054 + $0x8] sm:$0xff]
    %v1057 = vld [vmem:[%s1054 + $0x10] sm:$0xff]
    %v1058 = vld [vmem:[%s1054 + $0x18] sm:$0xff]
    %v1059 = vld [vmem:[%s1054 + $0x20] sm:$0xff]
    %v1060 = vld [vmem:[%s1054 + $0x28] sm:$0xff]
    %v1061 = vld [vmem:[%s1054 + $0x30] sm:$0xff]
    %v1062 = vld [vmem:[%s1054 + $0x38] sm:$0xff]
    %v1063 = vld [vmem:[%s1054 + $0x40] sm:$0xff]
    %v1064 = vld [vmem:[%s1054 + $0x48] sm:$0xff]
    %v1065 = vld [vmem:[%s1054 + $0x50] sm:$0xff]
    %v1066 = vld [vmem:[%s1054 + $0x58] sm:$0xff]
    %v1067 = vld [vmem:[%s1054 + $0x60] sm:$0xff]
    %v1068 = vld [vmem:[%s1054 + $0x68] sm:$0xff]
    %v1069 = vld [vmem:[%s1054 + $0x70] sm:$0xff]
    %v1070 = vld [vmem:[%s1054 + $0x78] sm:$0xff]
    %v1071 = vld [vmem:[%s1054 + $0x80] sm:$0xff]
    %v1072 = vld [vmem:[%s1054 + $0x88] sm:$0xff]
    %v1073 = vld [vmem:[%s1054 + $0x90] sm:$0xff]
    %v1074 = vld [vmem:[%s1054 + $0x98] sm:$0xff]
    %v1075 = vld [vmem:[%s1054 + $0xa0] sm:$0xff]
    %v1076 = vld [vmem:[%s1054 + $0xa8] sm:$0xff]
    %v1077 = vld [vmem:[%s1054 + $0xb0] sm:$0xff]
    %v1078 = vld [vmem:[%s1054 + $0xb8] sm:$0xff]
    %v1079 = vld [vmem:[%s1054 + $0xc0] sm:$0xff]
    %v1080 = vld [vmem:[%s1054 + $0xc8] sm:$0xff]
    %v1081 = vld [vmem:[%s1054 + $0xd0] sm:$0xff]
    %v1082 = vld [vmem:[%s1054 + $0xd8] sm:$0xff]
    %v1083 = vld [vmem:[%s1054 + $0xe0] sm:$0xff]
    %v1084 = vld [vmem:[%s1054 + $0xe8] sm:$0xff]
    %v1085 = vld [vmem:[%s1054 + $0xf0] sm:$0xff]
    %v1086 = vld [vmem:[%s1054 + $0xf8] sm:$0xff]
    %v1119 = vunpack.c.l.b16 %v1055
    %v1120 = vunpack.c.h.b16 %v1055
    %v1121 = vunpack.c.l.b16 %v1056
    %v1122 = vunpack.c.h.b16 %v1056
    %v1123 = vunpack.c.l.b16 %v1057
    %v1124 = vunpack.c.h.b16 %v1057
    %v1125 = vunpack.c.l.b16 %v1058
    %v1126 = vunpack.c.h.b16 %v1058
    %v1127 = vunpack.c.l.b16 %v1059
    %v1128 = vunpack.c.h.b16 %v1059
    %v1129 = vunpack.c.l.b16 %v1060
    %v1130 = vunpack.c.h.b16 %v1060
    %v1131 = vunpack.c.l.b16 %v1061
    %v1132 = vunpack.c.h.b16 %v1061
    %v1133 = vunpack.c.l.b16 %v1062
    %v1134 = vunpack.c.h.b16 %v1062
    %v1135 = vunpack.c.l.b16 %v1063
    %v1136 = vunpack.c.h.b16 %v1063
    %v1137 = vunpack.c.l.b16 %v1064
    %v1138 = vunpack.c.h.b16 %v1064
    %v1139 = vunpack.c.l.b16 %v1065
    %v1140 = vunpack.c.h.b16 %v1065
    %v1141 = vunpack.c.l.b16 %v1066
    %v1142 = vunpack.c.h.b16 %v1066
    %v1143 = vunpack.c.l.b16 %v1067
    %v1144 = vunpack.c.h.b16 %v1067
    %v1145 = vunpack.c.l.b16 %v1068
    %v1146 = vunpack.c.h.b16 %v1068
    %v1147 = vunpack.c.l.b16 %v1069
    %v1148 = vunpack.c.h.b16 %v1069
    %v1149 = vunpack.c.l.b16 %v1070
    %v1150 = vunpack.c.h.b16 %v1070
    %v1151 = vunpack.c.l.b16 %v1071
    %v1152 = vunpack.c.h.b16 %v1071
    %v1153 = vunpack.c.l.b16 %v1072
    %v1154 = vunpack.c.h.b16 %v1072
    %v1155 = vunpack.c.l.b16 %v1073
    %v1156 = vunpack.c.h.b16 %v1073
    %v1157 = vunpack.c.l.b16 %v1074
    %v1158 = vunpack.c.h.b16 %v1074
    %v1159 = vunpack.c.l.b16 %v1075
    %v1160 = vunpack.c.h.b16 %v1075
    %v1161 = vunpack.c.l.b16 %v1076
    %v1162 = vunpack.c.h.b16 %v1076
    %v1163 = vunpack.c.l.b16 %v1077
    %v1164 = vunpack.c.h.b16 %v1077
    %v1165 = vunpack.c.l.b16 %v1078
    %v1166 = vunpack.c.h.b16 %v1078
    %v1167 = vunpack.c.l.b16 %v1079
    %v1168 = vunpack.c.h.b16 %v1079
    %v1169 = vunpack.c.l.b16 %v1080
    %v1170 = vunpack.c.h.b16 %v1080
    %v1171 = vunpack.c.l.b16 %v1081
    %v1172 = vunpack.c.h.b16 %v1081
    %v1173 = vunpack.c.l.b16 %v1082
    %v1174 = vunpack.c.h.b16 %v1082
    %v1175 = vunpack.c.l.b16 %v1083
    %v1176 = vunpack.c.h.b16 %v1083
    %v1177 = vunpack.c.l.b16 %v1084
    %v1178 = vunpack.c.h.b16 %v1084
    %v1179 = vunpack.c.l.b16 %v1085
    %v1180 = vunpack.c.h.b16 %v1085
    %v1181 = vunpack.c.l.b16 %v1086
    %v1182 = vunpack.c.h.b16 %v1086
    %v1183 = vpack.c.b16 %v1121, %v1119
    %v1184 = vpack.c.b16 %v1122, %v1120
    %v1185 = vpack.c.b16 %v1125, %v1123
    %v1186 = vpack.c.b16 %v1126, %v1124
    %v1187 = vpack.c.b16 %v1129, %v1127
    %v1188 = vpack.c.b16 %v1130, %v1128
    %v1189 = vpack.c.b16 %v1133, %v1131
    %v1190 = vpack.c.b16 %v1134, %v1132
    %v1191 = vpack.c.b16 %v1137, %v1135
    %v1192 = vpack.c.b16 %v1138, %v1136
    %v1193 = vpack.c.b16 %v1141, %v1139
    %v1194 = vpack.c.b16 %v1142, %v1140
    %v1195 = vpack.c.b16 %v1145, %v1143
    %v1196 = vpack.c.b16 %v1146, %v1144
    %v1197 = vpack.c.b16 %v1149, %v1147
    %v1198 = vpack.c.b16 %v1150, %v1148
    %v1199 = vpack.c.b16 %v1153, %v1151
    %v1200 = vpack.c.b16 %v1154, %v1152
    %v1201 = vpack.c.b16 %v1157, %v1155
    %v1202 = vpack.c.b16 %v1158, %v1156
    %v1203 = vpack.c.b16 %v1161, %v1159
    %v1204 = vpack.c.b16 %v1162, %v1160
    %v1205 = vpack.c.b16 %v1165, %v1163
    %v1206 = vpack.c.b16 %v1166, %v1164
    %v1207 = vpack.c.b16 %v1169, %v1167
    %v1208 = vpack.c.b16 %v1170, %v1168
    %v1209 = vpack.c.b16 %v1173, %v1171
    %v1210 = vpack.c.b16 %v1174, %v1172
    %v1211 = vpack.c.b16 %v1177, %v1175
    %v1212 = vpack.c.b16 %v1178, %v1176
    %v1213 = vpack.c.b16 %v1181, %v1179
    %v1214 = vpack.c.b16 %v1182, %v1180
    %1247 = vmatprep.subr.bf16.mxu0 %v1184
    %1248 = vmatpush1.bf16.msra.mxu0 %v1183
    %1249 = vmatprep.subr.bf16.mxu0 %v1186
    %1250 = vmatpush1.bf16.msra.mxu0 %v1185
    %1251 = vmatprep.subr.bf16.mxu0 %v1188
    %1252 = vmatpush1.bf16.msra.mxu0 %v1187
    %1253 = vmatprep.subr.bf16.mxu0 %v1190
    %1254 = vmatpush1.bf16.msra.mxu0 %v1189
    %1255 = vmatprep.subr.bf16.mxu0 %v1192
    %1256 = vmatpush1.bf16.msra.mxu0 %v1191
    %1257 = vmatprep.subr.bf16.mxu0 %v1194
    %1258 = vmatpush1.bf16.msra.mxu0 %v1193
    %1259 = vmatprep.subr.bf16.mxu0 %v1196
    %1260 = vmatpush1.bf16.msra.mxu0 %v1195
    %1261 = vmatprep.subr.bf16.mxu0 %v1198
    %1262 = vmatpush1.bf16.msra.mxu0 %v1197
    %1263 = vmatprep.subr.bf16.mxu0 %v1200
    %1264 = vmatpush1.bf16.msra.mxu0 %v1199
    %1265 = vmatprep.subr.bf16.mxu0 %v1202
    %1266 = vmatpush1.bf16.msra.mxu0 %v1201
    %1267 = vmatprep.subr.bf16.mxu0 %v1204
    %1268 = vmatpush1.bf16.msra.mxu0 %v1203
    %1269 = vmatprep.subr.bf16.mxu0 %v1206
    %1270 = vmatpush1.bf16.msra.mxu0 %v1205
    %1271 = vmatprep.subr.bf16.mxu0 %v1208
    %1272 = vmatpush1.bf16.msra.mxu0 %v1207
    %1273 = vmatprep.subr.bf16.mxu0 %v1210
    %1274 = vmatpush1.bf16.msra.mxu0 %v1209
    %1275 = vmatprep.subr.bf16.mxu0 %v1212
    %1276 = vmatpush1.bf16.msra.mxu0 %v1211
    %1277 = vmatprep.subr.bf16.mxu0 %v1214
    %1278 = vmatpush1.bf16.msra.mxu0 %v1213
    %1279 = vmatprep.mubr.bf16.mxu0 %v1051
    %1280 = vmatmul.mubr.bf16.gmra.mrb[0].mxu0 %v1050
    %v1281 = vpop.f32.mrb[0].mxu0
    %v1282 = vadd.f32 0.0, %v1281
    %v1283 = vpop.f32.mrb[0].mxu0
    %v1284 = vadd.f32 0.0, %v1283
    %v1285 = vpop.f32.mrb[0].mxu0
    %v1286 = vadd.f32 0.0, %v1285
    %v1287 = vpop.f32.mrb[0].mxu0
    %v1288 = vadd.f32 0.0, %v1287
    %1289 = vmatprep.mubr.bf16.mxu0 %v1053
    %1290 = vmatmul.mubr.bf16.gmra.mrb[0].mxu0 %v1052
    %v1291 = vpop.f32.mrb[0].mxu0
    %v1292 = vadd.f32 0.0, %v1291
    %v1293 = vpop.f32.mrb[0].mxu0
    %v1294 = vadd.f32 0.0, %v1293
    %v1295 = vpop.f32.mrb[0].mxu0
    %v1296 = vadd.f32 0.0, %v1295
    %v1297 = vpop.f32.mrb[0].mxu0
    %v1298 = vadd.f32 0.0, %v1297
    %1299 = vdwg.mxu0
    %v1332 = vunpack.c.l.b16 %v1018
    %v1333 = vunpack.c.h.b16 %v1018
    %v1334 = vunpack.c.l.b16 %v1019
    %v1335 = vunpack.c.h.b16 %v1019
    %v1336 = vunpack.c.l.b16 %v1020
    %v1337 = vunpack.c.h.b16 %v1020
    %v1338 = vunpack.c.l.b16 %v1021
    %v1339 = vunpack.c.h.b16 %v1021
    %v1340 = vunpack.c.l.b16 %v1022
    %v1341 = vunpack.c.h.b16 %v1022
    %v1342 = vunpack.c.l.b16 %v1023
    %v1343 = vunpack.c.h.b16 %v1023
    %v1344 = vunpack.c.l.b16 %v1024
    %v1345 = vunpack.c.h.b16 %v1024
    %v1346 = vunpack.c.l.b16 %v1025
    %v1347 = vunpack.c.h.b16 %v1025
    %v1348 = vunpack.c.l.b16 %v1026
    %v1349 = vunpack.c.h.b16 %v1026
    %v1350 = vunpack.c.l.b16 %v1027
    %v1351 = vunpack.c.h.b16 %v1027
    %v1352 = vunpack.c.l.b16 %v1028
    %v1353 = vunpack.c.h.b16 %v1028
    %v1354 = vunpack.c.l.b16 %v1029
    %v1355 = vunpack.c.h.b16 %v1029
    %v1356 = vunpack.c.l.b16 %v1030
    %v1357 = vunpack.c.h.b16 %v1030
    %v1358 = vunpack.c.l.b16 %v1031
    %v1359 = vunpack.c.h.b16 %v1031
    %v1360 = vunpack.c.l.b16 %v1032
    %v1361 = vunpack.c.h.b16 %v1032
    %v1362 = vunpack.c.l.b16 %v1033
    %v1363 = vunpack.c.h.b16 %v1033
    %v1364 = vunpack.c.l.b16 %v1034
    %v1365 = vunpack.c.h.b16 %v1034
    %v1366 = vunpack.c.l.b16 %v1035
    %v1367 = vunpack.c.h.b16 %v1035
    %v1368 = vunpack.c.l.b16 %v1036
    %v1369 = vunpack.c.h.b16 %v1036
    %v1370 = vunpack.c.l.b16 %v1037
    %v1371 = vunpack.c.h.b16 %v1037
    %v1372 = vunpack.c.l.b16 %v1038
    %v1373 = vunpack.c.h.b16 %v1038
    %v1374 = vunpack.c.l.b16 %v1039
    %v1375 = vunpack.c.h.b16 %v1039
    %v1376 = vunpack.c.l.b16 %v1040
    %v1377 = vunpack.c.h.b16 %v1040
    %v1378 = vunpack.c.l.b16 %v1041
    %v1379 = vunpack.c.h.b16 %v1041
    %v1380 = vunpack.c.l.b16 %v1042
    %v1381 = vunpack.c.h.b16 %v1042
    %v1382 = vunpack.c.l.b16 %v1043
    %v1383 = vunpack.c.h.b16 %v1043
    %v1384 = vunpack.c.l.b16 %v1044
    %v1385 = vunpack.c.h.b16 %v1044
    %v1386 = vunpack.c.l.b16 %v1045
    %v1387 = vunpack.c.h.b16 %v1045
    %v1388 = vunpack.c.l.b16 %v1046
    %v1389 = vunpack.c.h.b16 %v1046
    %v1390 = vunpack.c.l.b16 %v1047
    %v1391 = vunpack.c.h.b16 %v1047
    %v1392 = vunpack.c.l.b16 %v1048
    %v1393 = vunpack.c.h.b16 %v1048
    %v1394 = vunpack.c.l.b16 %v1049
    %v1395 = vunpack.c.h.b16 %v1049
    %v1396 = vpack.c.b16 %v1334, %v1332
    %v1397 = vpack.c.b16 %v1335, %v1333
    %v1398 = vpack.c.b16 %v1338, %v1336
    %v1399 = vpack.c.b16 %v1339, %v1337
    %v1400 = vpack.c.b16 %v1342, %v1340
    %v1401 = vpack.c.b16 %v1343, %v1341
    %v1402 = vpack.c.b16 %v1346, %v1344
    %v1403 = vpack.c.b16 %v1347, %v1345
    %v1404 = vpack.c.b16 %v1350, %v1348
    %v1405 = vpack.c.b16 %v1351, %v1349
    %v1406 = vpack.c.b16 %v1354, %v1352
    %v1407 = vpack.c.b16 %v1355, %v1353
    %v1408 = vpack.c.b16 %v1358, %v1356
    %v1409 = vpack.c.b16 %v1359, %v1357
    %v1410 = vpack.c.b16 %v1362, %v1360
    %v1411 = vpack.c.b16 %v1363, %v1361
    %v1412 = vpack.c.b16 %v1366, %v1364
    %v1413 = vpack.c.b16 %v1367, %v1365
    %v1414 = vpack.c.b16 %v1370, %v1368
    %v1415 = vpack.c.b16 %v1371, %v1369
    %v1416 = vpack.c.b16 %v1374, %v1372
    %v1417 = vpack.c.b16 %v1375, %v1373
    %v1418 = vpack.c.b16 %v1378, %v1376
    %v1419 = vpack.c.b16 %v1379, %v1377
    %v1420 = vpack.c.b16 %v1382, %v1380
    %v1421 = vpack.c.b16 %v1383, %v1381
    %v1422 = vpack.c.b16 %v1386, %v1384
    %v1423 = vpack.c.b16 %v1387, %v1385
    %v1424 = vpack.c.b16 %v1390, %v1388
    %v1425 = vpack.c.b16 %v1391, %v1389
    %v1426 = vpack.c.b16 %v1394, %v1392
    %v1427 = vpack.c.b16 %v1395, %v1393
    %1460 = vmatprep.subr.bf16.mxu0 %v1397
    %1461 = vmatpush1.bf16.msra.mxu0 %v1396
    %1462 = vmatprep.subr.bf16.mxu0 %v1399
    %1463 = vmatpush1.bf16.msra.mxu0 %v1398
    %1464 = vmatprep.subr.bf16.mxu0 %v1401
    %1465 = vmatpush1.bf16.msra.mxu0 %v1400
    %1466 = vmatprep.subr.bf16.mxu0 %v1403
    %1467 = vmatpush1.bf16.msra.mxu0 %v1402
    %1468 = vmatprep.subr.bf16.mxu0 %v1405
    %1469 = vmatpush1.bf16.msra.mxu0 %v1404
    %1470 = vmatprep.subr.bf16.mxu0 %v1407
    %1471 = vmatpush1.bf16.msra.mxu0 %v1406
    %1472 = vmatprep.subr.bf16.mxu0 %v1409
    %1473 = vmatpush1.bf16.msra.mxu0 %v1408
    %1474 = vmatprep.subr.bf16.mxu0 %v1411
    %1475 = vmatpush1.bf16.msra.mxu0 %v1410
    %1476 = vmatprep.subr.bf16.mxu0 %v1413
    %1477 = vmatpush1.bf16.msra.mxu0 %v1412
    %1478 = vmatprep.subr.bf16.mxu0 %v1415
    %1479 = vmatpush1.bf16.msra.mxu0 %v1414
    %1480 = vmatprep.subr.bf16.mxu0 %v1417
    %1481 = vmatpush1.bf16.msra.mxu0 %v1416
    %1482 = vmatprep.subr.bf16.mxu0 %v1419
    %1483 = vmatpush1.bf16.msra.mxu0 %v1418
    %1484 = vmatprep.subr.bf16.mxu0 %v1421
    %1485 = vmatpush1.bf16.msra.mxu0 %v1420
    %1486 = vmatprep.subr.bf16.mxu0 %v1423
    %1487 = vmatpush1.bf16.msra.mxu0 %v1422
    %1488 = vmatprep.subr.bf16.mxu0 %v1425
    %1489 = vmatpush1.bf16.msra.mxu0 %v1424
    %1490 = vmatprep.subr.bf16.mxu0 %v1427
    %1491 = vmatpush1.bf16.msra.mxu0 %v1426
    %1492 = vmatprep.mubr.bf16.mxu0 %v1015
    %1493 = vmatmul.mubr.bf16.gmra.mrb[0].mxu0 %v1014
    %v1494 = vpop.f32.mrb[0].mxu0
    %v1495 = vadd.f32 %v1282, %v1494
    %v1496 = vpop.f32.mrb[0].mxu0
    %v1497 = vadd.f32 %v1284, %v1496
    %v1498 = vpop.f32.mrb[0].mxu0
    %v1499 = vadd.f32 %v1286, %v1498
    %v1500 = vpop.f32.mrb[0].mxu0
    %v1501 = vadd.f32 %v1288, %v1500
    %1502 = vmatprep.mubr.bf16.mxu0 %v1017
    %1503 = vmatmul.mubr.bf16.gmra.mrb[0].mxu0 %v1016
    %v1504 = vpop.f32.mrb[0].mxu0
    %v1505 = vadd.f32 %v1292, %v1504
    %v1506 = vpop.f32.mrb[0].mxu0
    %v1507 = vadd.f32 %v1294, %v1506
    %v1508 = vpop.f32.mrb[0].mxu0
    %v1509 = vadd.f32 %v1296, %v1508
    %v1510 = vpop.f32.mrb[0].mxu0
    %v1511 = vadd.f32 %v1298, %v1510
    %1512 = vdwg.mxu0
    %v1513 = vpack.c.bf16 %v1008, %v1006
    %v1514 = vpack.c.bf16 %v1009, %v1007
    %v1515 = vpack.c.bf16 %v1012, %v1010
    %v1516 = vpack.c.bf16 %v1013, %v1011
    %s1517 = scalar_lea.vmem [#allocation5], 512
    %v1518 = vld [vmem:[%s1517] sm:$0xff]
    %v1519 = vld [vmem:[%s1517 + $0x8] sm:$0xff]
    %v1520 = vld [vmem:[%s1517 + $0x10] sm:$0xff]
    %v1521 = vld [vmem:[%s1517 + $0x18] sm:$0xff]
    %v1522 = vld [vmem:[%s1517 + $0x20] sm:$0xff]
    %v1523 = vld [vmem:[%s1517 + $0x28] sm:$0xff]
    %v1524 = vld [vmem:[%s1517 + $0x30] sm:$0xff]
    %v1525 = vld [vmem:[%s1517 + $0x38] sm:$0xff]
    %v1526 = vld [vmem:[%s1517 + $0x40] sm:$0xff]
    %v1527 = vld [vmem:[%s1517 + $0x48] sm:$0xff]
    %v1528 = vld [vmem:[%s1517 + $0x50] sm:$0xff]
    %v1529 = vld [vmem:[%s1517 + $0x58] sm:$0xff]
    %v1530 = vld [vmem:[%s1517 + $0x60] sm:$0xff]
    %v1531 = vld [vmem:[%s1517 + $0x68] sm:$0xff]
    %v1532 = vld [vmem:[%s1517 + $0x70] sm:$0xff]
    %v1533 = vld [vmem:[%s1517 + $0x78] sm:$0xff]
    %v1534 = vld [vmem:[%s1517 + $0x80] sm:$0xff]
    %v1535 = vld [vmem:[%s1517 + $0x88] sm:$0xff]
    %v1536 = vld [vmem:[%s1517 + $0x90] sm:$0xff]
    %v1537 = vld [vmem:[%s1517 + $0x98] sm:$0xff]
    %v1538 = vld [vmem:[%s1517 + $0xa0] sm:$0xff]
    %v1539 = vld [vmem:[%s1517 + $0xa8] sm:$0xff]
    %v1540 = vld [vmem:[%s1517 + $0xb0] sm:$0xff]
    %v1541 = vld [vmem:[%s1517 + $0xb8] sm:$0xff]
    %v1542 = vld [vmem:[%s1517 + $0xc0] sm:$0xff]
    %v1543 = vld [vmem:[%s1517 + $0xc8] sm:$0xff]
    %v1544 = vld [vmem:[%s1517 + $0xd0] sm:$0xff]
    %v1545 = vld [vmem:[%s1517 + $0xd8] sm:$0xff]
    %v1546 = vld [vmem:[%s1517 + $0xe0] sm:$0xff]
    %v1547 = vld [vmem:[%s1517 + $0xe8] sm:$0xff]
    %v1548 = vld [vmem:[%s1517 + $0xf0] sm:$0xff]
    %v1549 = vld [vmem:[%s1517 + $0xf8] sm:$0xff]
    %v1582 = vunpack.c.l.b16 %v1518
    %v1583 = vunpack.c.h.b16 %v1518
    %v1584 = vunpack.c.l.b16 %v1519
    %v1585 = vunpack.c.h.b16 %v1519
    %v1586 = vunpack.c.l.b16 %v1520
    %v1587 = vunpack.c.h.b16 %v1520
    %v1588 = vunpack.c.l.b16 %v1521
    %v1589 = vunpack.c.h.b16 %v1521
    %v1590 = vunpack.c.l.b16 %v1522
    %v1591 = vunpack.c.h.b16 %v1522
    %v1592 = vunpack.c.l.b16 %v1523
    %v1593 = vunpack.c.h.b16 %v1523
    %v1594 = vunpack.c.l.b16 %v1524
    %v1595 = vunpack.c.h.b16 %v1524
    %v1596 = vunpack.c.l.b16 %v1525
    %v1597 = vunpack.c.h.b16 %v1525
    %v1598 = vunpack.c.l.b16 %v1526
    %v1599 = vunpack.c.h.b16 %v1526
    %v1600 = vunpack.c.l.b16 %v1527
    %v1601 = vunpack.c.h.b16 %v1527
    %v1602 = vunpack.c.l.b16 %v1528
    %v1603 = vunpack.c.h.b16 %v1528
    %v1604 = vunpack.c.l.b16 %v1529
    %v1605 = vunpack.c.h.b16 %v1529
    %v1606 = vunpack.c.l.b16 %v1530
    %v1607 = vunpack.c.h.b16 %v1530
    %v1608 = vunpack.c.l.b16 %v1531
    %v1609 = vunpack.c.h.b16 %v1531
    %v1610 = vunpack.c.l.b16 %v1532
    %v1611 = vunpack.c.h.b16 %v1532
    %v1612 = vunpack.c.l.b16 %v1533
    %v1613 = vunpack.c.h.b16 %v1533
    %v1614 = vunpack.c.l.b16 %v1534
    %v1615 = vunpack.c.h.b16 %v1534
    %v1616 = vunpack.c.l.b16 %v1535
    %v1617 = vunpack.c.h.b16 %v1535
    %v1618 = vunpack.c.l.b16 %v1536
    %v1619 = vunpack.c.h.b16 %v1536
    %v1620 = vunpack.c.l.b16 %v1537
    %v1621 = vunpack.c.h.b16 %v1537
    %v1622 = vunpack.c.l.b16 %v1538
    %v1623 = vunpack.c.h.b16 %v1538
    %v1624 = vunpack.c.l.b16 %v1539
    %v1625 = vunpack.c.h.b16 %v1539
    %v1626 = vunpack.c.l.b16 %v1540
    %v1627 = vunpack.c.h.b16 %v1540
    %v1628 = vunpack.c.l.b16 %v1541
    %v1629 = vunpack.c.h.b16 %v1541
    %v1630 = vunpack.c.l.b16 %v1542
    %v1631 = vunpack.c.h.b16 %v1542
    %v1632 = vunpack.c.l.b16 %v1543
    %v1633 = vunpack.c.h.b16 %v1543
    %v1634 = vunpack.c.l.b16 %v1544
    %v1635 = vunpack.c.h.b16 %v1544
    %v1636 = vunpack.c.l.b16 %v1545
    %v1637 = vunpack.c.h.b16 %v1545
    %v1638 = vunpack.c.l.b16 %v1546
    %v1639 = vunpack.c.h.b16 %v1546
    %v1640 = vunpack.c.l.b16 %v1547
    %v1641 = vunpack.c.h.b16 %v1547
    %v1642 = vunpack.c.l.b16 %v1548
    %v1643 = vunpack.c.h.b16 %v1548
    %v1644 = vunpack.c.l.b16 %v1549
    %v1645 = vunpack.c.h.b16 %v1549
    %v1646 = vpack.c.b16 %v1584, %v1582
    %v1647 = vpack.c.b16 %v1585, %v1583
    %v1648 = vpack.c.b16 %v1588, %v1586
    %v1649 = vpack.c.b16 %v1589, %v1587
    %v1650 = vpack.c.b16 %v1592, %v1590
    %v1651 = vpack.c.b16 %v1593, %v1591
    %v1652 = vpack.c.b16 %v1596, %v1594
    %v1653 = vpack.c.b16 %v1597, %v1595
    %v1654 = vpack.c.b16 %v1600, %v1598
    %v1655 = vpack.c.b16 %v1601, %v1599
    %v1656 = vpack.c.b16 %v1604, %v1602
    %v1657 = vpack.c.b16 %v1605, %v1603
    %v1658 = vpack.c.b16 %v1608, %v1606
    %v1659 = vpack.c.b16 %v1609, %v1607
    %v1660 = vpack.c.b16 %v1612, %v1610
    %v1661 = vpack.c.b16 %v1613, %v1611
    %v1662 = vpack.c.b16 %v1616, %v1614
    %v1663 = vpack.c.b16 %v1617, %v1615
    %v1664 = vpack.c.b16 %v1620, %v1618
    %v1665 = vpack.c.b16 %v1621, %v1619
    %v1666 = vpack.c.b16 %v1624, %v1622
    %v1667 = vpack.c.b16 %v1625, %v1623
    %v1668 = vpack.c.b16 %v1628, %v1626
    %v1669 = vpack.c.b16 %v1629, %v1627
    %v1670 = vpack.c.b16 %v1632, %v1630
    %v1671 = vpack.c.b16 %v1633, %v1631
    %v1672 = vpack.c.b16 %v1636, %v1634
    %v1673 = vpack.c.b16 %v1637, %v1635
    %v1674 = vpack.c.b16 %v1640, %v1638
    %v1675 = vpack.c.b16 %v1641, %v1639
    %v1676 = vpack.c.b16 %v1644, %v1642
    %v1677 = vpack.c.b16 %v1645, %v1643
    %1710 = vmatprep.subr.bf16.mxu0 %v1647
    %1711 = vmatpush1.bf16.msra.mxu0 %v1646
    %1712 = vmatprep.subr.bf16.mxu0 %v1649
    %1713 = vmatpush1.bf16.msra.mxu0 %v1648
    %1714 = vmatprep.subr.bf16.mxu0 %v1651
    %1715 = vmatpush1.bf16.msra.mxu0 %v1650
    %1716 = vmatprep.subr.bf16.mxu0 %v1653
    %1717 = vmatpush1.bf16.msra.mxu0 %v1652
    %1718 = vmatprep.subr.bf16.mxu0 %v1655
    %1719 = vmatpush1.bf16.msra.mxu0 %v1654
    %1720 = vmatprep.subr.bf16.mxu0 %v1657
    %1721 = vmatpush1.bf16.msra.mxu0 %v1656
    %1722 = vmatprep.subr.bf16.mxu0 %v1659
    %1723 = vmatpush1.bf16.msra.mxu0 %v1658
    %1724 = vmatprep.subr.bf16.mxu0 %v1661
    %1725 = vmatpush1.bf16.msra.mxu0 %v1660
    %1726 = vmatprep.subr.bf16.mxu0 %v1663
    %1727 = vmatpush1.bf16.msra.mxu0 %v1662
    %1728 = vmatprep.subr.bf16.mxu0 %v1665
    %1729 = vmatpush1.bf16.msra.mxu0 %v1664
    %1730 = vmatprep.subr.bf16.mxu0 %v1667
    %1731 = vmatpush1.bf16.msra.mxu0 %v1666
    %1732 = vmatprep.subr.bf16.mxu0 %v1669
    %1733 = vmatpush1.bf16.msra.mxu0 %v1668
    %1734 = vmatprep.subr.bf16.mxu0 %v1671
    %1735 = vmatpush1.bf16.msra.mxu0 %v1670
    %1736 = vmatprep.subr.bf16.mxu0 %v1673
    %1737 = vmatpush1.bf16.msra.mxu0 %v1672
    %1738 = vmatprep.subr.bf16.mxu0 %v1675
    %1739 = vmatpush1.bf16.msra.mxu0 %v1674
    %1740 = vmatprep.subr.bf16.mxu0 %v1677
    %1741 = vmatpush1.bf16.msra.mxu0 %v1676
    %1742 = vmatprep.mubr.bf16.mxu0 %v1514
    %1743 = vmatmul.mubr.bf16.gmra.mrb[0].mxu0 %v1513
    %v1744 = vpop.f32.mrb[0].mxu0
    %v1745 = vadd.f32 0.0, %v1744
    %v1746 = vpop.f32.mrb[0].mxu0
    %v1747 = vadd.f32 0.0, %v1746
    %v1748 = vpop.f32.mrb[0].mxu0
    %v1749 = vadd.f32 0.0, %v1748
    %v1750 = vpop.f32.mrb[0].mxu0
    %v1751 = vadd.f32 0.0, %v1750
    %1752 = vmatprep.mubr.bf16.mxu0 %v1516
    %1753 = vmatmul.mubr.bf16.gmra.mrb[0].mxu0 %v1515
    %v1754 = vpop.f32.mrb[0].mxu0
    %v1755 = vadd.f32 0.0, %v1754
    %v1756 = vpop.f32.mrb[0].mxu0
    %v1757 = vadd.f32 0.0, %v1756
    %v1758 = vpop.f32.mrb[0].mxu0
    %v1759 = vadd.f32 0.0, %v1758
    %v1760 = vpop.f32.mrb[0].mxu0
    %v1761 = vadd.f32 0.0, %v1760
    %1762 = vdwg.mxu0
    %v1763 = vadd.f32 %v1495, %v1745
    %v1764 = vadd.f32 %v1497, %v1747
    %v1765 = vadd.f32 %v1499, %v1749
    %v1766 = vadd.f32 %v1501, %v1751
    %v1767 = vadd.f32 %v1505, %v1755
    %v1768 = vadd.f32 %v1507, %v1757
    %v1769 = vadd.f32 %v1509, %v1759
    %v1770 = vadd.f32 %v1511, %v1761
    %v1771 = vld [vmem:[%s4] sm:$0x3]
    %v1773 = vlaneseq
    %v1774 = vshrl.u32 %v1773, 7
    %v1775 = vsub.s32 0, %v1774
    %v1776 = vrot.slane %v1771, %v1775
    %v1777 = vlaneseq
    %v1778 = vshrl.u32 %v1777, 7
    %v1779 = vsub.s32 1, %v1778
    %v1780 = vrot.slane %v1771, %v1779
    %v1783 = vadd.f32 %v1763, %v1776
    %v1784 = vadd.f32 %v1764, %v1780
    %v1785 = vadd.f32 %v1765, %v1776
    %v1786 = vadd.f32 %v1766, %v1780
    %v1787 = vadd.f32 %v1767, %v1776
    %v1788 = vadd.f32 %v1768, %v1780
    %v1789 = vadd.f32 %v1769, %v1776
    %v1790 = vadd.f32 %v1770, %v1780
    %v1791 = vld [vmem:[%s11] sm:$0x3]
    %vm1792 = vcmask 261120
    %v1794 = vsel %vm1792, %v1791, 0
    %1796 = vmatprep.subr.mxu0 %v1784
    %1797 = vmatpush1.msra.mxu0 %v1783
    %1798 = vmatprep.subr.mxu0 %v1786
    %1799 = vmatpush1.msra.mxu0 %v1785
    %1800 = vmatprep.subr.mxu0 %v1788
    %1801 = vmatpush1.msra.mxu0 %v1787
    %1802 = vmatprep.subr.mxu0 %v1790
    %1803 = vmatpush1.msra.mxu0 %v1789
    %1804 = vmatprep.subr.mxu0 0.0
    %1805 = vmatpush1.msra.mxu0 0.0
    %1806 = vmatprep.subr.mxu0 0.0
    %1807 = vmatpush1.msra.mxu0 0.0
    %1808 = vmatprep.subr.mxu0 0.0
    %1809 = vmatpush1.msra.mxu0 0.0
    %1810 = vmatprep.subr.mxu0 0.0
    %1811 = vmatpush1.msra.mxu0 0.0
    %1812 = vmatprep.subr.mxu0 0.0
    %1813 = vmatpush1.msra.mxu0 0.0
    %1814 = vmatprep.subr.mxu0 0.0
    %1815 = vmatpush1.msra.mxu0 0.0
    %1816 = vmatprep.subr.mxu0 0.0
    %1817 = vmatpush1.msra.mxu0 0.0
    %1818 = vmatprep.subr.mxu0 0.0
    %1819 = vmatpush1.msra.mxu0 0.0
    %1820 = vmatprep.subr.mxu0 0.0
    %1821 = vmatpush1.msra.mxu0 0.0
    %1822 = vmatprep.subr.mxu0 0.0
    %1823 = vmatpush1.msra.mxu0 0.0
    %1824 = vmatprep.subr.mxu0 0.0
    %1825 = vmatpush1.msra.mxu0 0.0
    %1826 = vmatprep.subr.mxu0 0.0
    %1827 = vmatpush1.msra.mxu0 0.0
    %1828 = vmatprep.subr.mxu0 0.0
    %1829 = vmatpush1.msra.mxu0 0.0
    %1830 = vmatprep.subr.mxu0 0.0
    %1831 = vmatpush1.msra.mxu0 0.0
    %1832 = vmatprep.subr.mxu0 0.0
    %1833 = vmatpush1.msra.mxu0 0.0
    %1834 = vmatprep.subr.mxu0 0.0
    %1835 = vmatpush1.msra.mxu0 0.0
    %1836 = vmatprep.subr.mxu0 0.0
    %1837 = vmatpush1.msra.mxu0 0.0
    %1838 = vmatprep.subr.mxu0 0.0
    %1839 = vmatpush1.msra.mxu0 0.0
    %1840 = vmatprep.subr.mxu0 0.0
    %1841 = vmatpush1.msra.mxu0 0.0
    %1842 = vmatprep.subr.mxu0 0.0
    %1843 = vmatpush1.msra.mxu0 0.0
    %1844 = vmatprep.subr.mxu0 0.0
    %1845 = vmatpush1.msra.mxu0 0.0
    %1846 = vmatprep.subr.mxu0 0.0
    %1847 = vmatpush1.msra.mxu0 0.0
    %1848 = vmatprep.subr.mxu0 0.0
    %1849 = vmatpush1.msra.mxu0 0.0
    %1850 = vmatprep.subr.mxu0 0.0
    %1851 = vmatpush1.msra.mxu0 0.0
    %1852 = vmatprep.subr.mxu0 0.0
    %1853 = vmatpush1.msra.mxu0 0.0
    %1854 = vmatprep.subr.mxu0 0.0
    %1855 = vmatpush1.msra.mxu0 0.0
    %1856 = vmatprep.subr.mxu0 0.0
    %1857 = vmatpush1.msra.mxu0 0.0
    %1858 = vmatprep.subr.mxu0 0.0
    %1859 = vmatpush1.msra.mxu0 0.0
    %1860 = vmatprep.mubr.f32.mxu0 0.0
    %1861 = vmatmul.mubr.f32.gmra.mrb[0].mxu0 %v1794
    %v1862 = vpop.f32.mrb[0].mxu0
    %v1863 = vadd.f32 0.0, %v1862
    %v1864 = vpop.f32.mrb[0].mxu0
    %v1865 = vadd.f32 0.0, %v1864
    %1866 = vdwg.mxu0
    %v1867 = vld [vmem:[%s7] sm:$0xff]
    %v1868 = vld [vmem:[%s7 + $0x8] sm:$0xff]
    %v1869 = vld [vmem:[%s7 + $0x10] sm:$0xff]
    %v1870 = vld [vmem:[%s7 + $0x18] sm:$0xff]
    %v1871 = vld [vmem:[%s7 + $0x20] sm:$0xff]
    %v1872 = vld [vmem:[%s7 + $0x28] sm:$0xff]
    %v1873 = vld [vmem:[%s7 + $0x30] sm:$0xff]
    %v1874 = vld [vmem:[%s7 + $0x38] sm:$0xff]
    %v1875 = vld [vmem:[%s7 + $0x40] sm:$0xff]
    %v1876 = vld [vmem:[%s7 + $0x48] sm:$0xff]
    %v1877 = vld [vmem:[%s7 + $0x50] sm:$0xff]
    %v1878 = vld [vmem:[%s7 + $0x58] sm:$0xff]
    %v1879 = vld [vmem:[%s7 + $0x60] sm:$0xff]
    %v1880 = vld [vmem:[%s7 + $0x68] sm:$0xff]
    %v1881 = vld [vmem:[%s7 + $0x70] sm:$0xff]
    %v1882 = vld [vmem:[%s7 + $0x78] sm:$0xff]
    %v1883 = vld [vmem:[%s7 + $0x80] sm:$0xff]
    %v1884 = vld [vmem:[%s7 + $0x88] sm:$0xff]
    %v1885 = vld [vmem:[%s7 + $0x90] sm:$0xff]
    %v1886 = vld [vmem:[%s7 + $0x98] sm:$0xff]
    %v1887 = vld [vmem:[%s7 + $0xa0] sm:$0xff]
    %v1888 = vld [vmem:[%s7 + $0xa8] sm:$0xff]
    %v1889 = vld [vmem:[%s7 + $0xb0] sm:$0xff]
    %v1890 = vld [vmem:[%s7 + $0xb8] sm:$0xff]
    %v1891 = vld [vmem:[%s7 + $0xc0] sm:$0xff]
    %v1892 = vld [vmem:[%s7 + $0xc8] sm:$0xff]
    %v1893 = vld [vmem:[%s7 + $0xd0] sm:$0xff]
    %v1894 = vld [vmem:[%s7 + $0xd8] sm:$0xff]
    %v1895 = vld [vmem:[%s7 + $0xe0] sm:$0xff]
    %v1896 = vld [vmem:[%s7 + $0xe8] sm:$0xff]
    %v1897 = vld [vmem:[%s7 + $0xf0] sm:$0xff]
    %v1898 = vld [vmem:[%s7 + $0xf8] sm:$0xff]
    %v1899 = vld [vmem:[%s8] sm:$0x1]
    %v1901 = vlaneseq
    %v1902 = vshrl.u32 %v1901, 7
    %v1903 = vsub.s32 0, %v1902
    %v1904 = vrot.slane %v1899, %v1903
    %1906 = vmatprep.subr.mxu0 0.0
    %1907 = vmatpush1.msra.mxu0 %v1867
    %1908 = vmatprep.subr.mxu0 0.0
    %1909 = vmatpush1.msra.mxu0 %v1868
    %1910 = vmatprep.subr.mxu0 0.0
    %1911 = vmatpush1.msra.mxu0 %v1869
    %1912 = vmatprep.subr.mxu0 0.0
    %1913 = vmatpush1.msra.mxu0 %v1870
    %1914 = vmatprep.subr.mxu0 0.0
    %1915 = vmatpush1.msra.mxu0 %v1871
    %1916 = vmatprep.subr.mxu0 0.0
    %1917 = vmatpush1.msra.mxu0 %v1872
    %1918 = vmatprep.subr.mxu0 0.0
    %1919 = vmatpush1.msra.mxu0 %v1873
    %1920 = vmatprep.subr.mxu0 0.0
    %1921 = vmatpush1.msra.mxu0 %v1874
    %1922 = vmatprep.subr.mxu0 0.0
    %1923 = vmatpush1.msra.mxu0 %v1875
    %1924 = vmatprep.subr.mxu0 0.0
    %1925 = vmatpush1.msra.mxu0 %v1876
    %1926 = vmatprep.subr.mxu0 0.0
    %1927 = vmatpush1.msra.mxu0 %v1877
    %1928 = vmatprep.subr.mxu0 0.0
    %1929 = vmatpush1.msra.mxu0 %v1878
    %1930 = vmatprep.subr.mxu0 0.0
    %1931 = vmatpush1.msra.mxu0 %v1879
    %1932 = vmatprep.subr.mxu0 0.0
    %1933 = vmatpush1.msra.mxu0 %v1880
    %1934 = vmatprep.subr.mxu0 0.0
    %1935 = vmatpush1.msra.mxu0 %v1881
    %1936 = vmatprep.subr.mxu0 0.0
    %1937 = vmatpush1.msra.mxu0 %v1882
    %1938 = vmatprep.subr.mxu0 0.0
    %1939 = vmatpush1.msra.mxu0 %v1883
    %1940 = vmatprep.subr.mxu0 0.0
    %1941 = vmatpush1.msra.mxu0 %v1884
    %1942 = vmatprep.subr.mxu0 0.0
    %1943 = vmatpush1.msra.mxu0 %v1885
    %1944 = vmatprep.subr.mxu0 0.0
    %1945 = vmatpush1.msra.mxu0 %v1886
    %1946 = vmatprep.subr.mxu0 0.0
    %1947 = vmatpush1.msra.mxu0 %v1887
    %1948 = vmatprep.subr.mxu0 0.0
    %1949 = vmatpush1.msra.mxu0 %v1888
    %1950 = vmatprep.subr.mxu0 0.0
    %1951 = vmatpush1.msra.mxu0 %v1889
    %1952 = vmatprep.subr.mxu0 0.0
    %1953 = vmatpush1.msra.mxu0 %v1890
    %1954 = vmatprep.subr.mxu0 0.0
    %1955 = vmatpush1.msra.mxu0 %v1891
    %1956 = vmatprep.subr.mxu0 0.0
    %1957 = vmatpush1.msra.mxu0 %v1892
    %1958 = vmatprep.subr.mxu0 0.0
    %1959 = vmatpush1.msra.mxu0 %v1893
    %1960 = vmatprep.subr.mxu0 0.0
    %1961 = vmatpush1.msra.mxu0 %v1894
    %1962 = vmatprep.subr.mxu0 0.0
    %1963 = vmatpush1.msra.mxu0 %v1895
    %1964 = vmatprep.subr.mxu0 0.0
    %1965 = vmatpush1.msra.mxu0 %v1896
    %1966 = vmatprep.subr.mxu0 0.0
    %1967 = vmatpush1.msra.mxu0 %v1897
    %1968 = vmatprep.subr.mxu0 0.0
    %1969 = vmatpush1.msra.mxu0 %v1898
    %1970 = vmatprep.mubr.f32.mxu0 %v1865
    %1971 = vmatmul.mubr.f32.gmra.mrb[0].mxu0 %v1863
    %v1972 = vpop.f32.mrb[0].mxu0
    %v1973 = vadd.f32 %v1904, %v1972
    %v1974 = vpop.f32.mrb[0].mxu0
    %1975 = vdwg.mxu0
    %v1976 = vmax.f32 %v1973, 0.0
    %v1977 = vld [vmem:[%s9] sm:$0xff]
    %v1978 = vld [vmem:[%s10] sm:$0x3]
    %v1980 = vlaneseq
    %v1981 = vshrl.u32 %v1980, 7
    %v1982 = vsub.s32 0, %v1981
    %v1983 = vrot.slane %v1978, %v1982
    %v1984 = vlaneseq
    %v1985 = vshrl.u32 %v1984, 7
    %v1986 = vsub.s32 1, %v1985
    %v1987 = vrot.slane %v1978, %v1986
    %v1991 = vcombine.high %v1977, %v1977
    %vm1992 = vcmask 31744
    %v1994 = vsel %vm1992, %v1976, 0
    %vm1996 = vcmask 1043456
    %v1997 = vsel %vm1996, %v1977, 0
    %v1999 = vsel %vm1996, %v1991, 0
    %2001 = vmatprep.subr.mxu0 %v1999
    %2002 = vmatpush1.msra.mxu0 %v1997
    %2003 = vmatprep.subr.mxu0 0.0
    %2004 = vmatpush1.msra.mxu0 0.0
    %2005 = vmatprep.subr.mxu0 0.0
    %2006 = vmatpush1.msra.mxu0 0.0
    %2007 = vmatprep.subr.mxu0 0.0
    %2008 = vmatpush1.msra.mxu0 0.0
    %2009 = vmatprep.subr.mxu0 0.0
    %2010 = vmatpush1.msra.mxu0 0.0
    %2011 = vmatprep.subr.mxu0 0.0
    %2012 = vmatpush1.msra.mxu0 0.0
    %2013 = vmatprep.subr.mxu0 0.0
    %2014 = vmatpush1.msra.mxu0 0.0
    %2015 = vmatprep.subr.mxu0 0.0
    %2016 = vmatpush1.msra.mxu0 0.0
    %2017 = vmatprep.subr.mxu0 0.0
    %2018 = vmatpush1.msra.mxu0 0.0
    %2019 = vmatprep.subr.mxu0 0.0
    %2020 = vmatpush1.msra.mxu0 0.0
    %2021 = vmatprep.subr.mxu0 0.0
    %2022 = vmatpush1.msra.mxu0 0.0
    %2023 = vmatprep.subr.mxu0 0.0
    %2024 = vmatpush1.msra.mxu0 0.0
    %2025 = vmatprep.subr.mxu0 0.0
    %2026 = vmatpush1.msra.mxu0 0.0
    %2027 = vmatprep.subr.mxu0 0.0
    %2028 = vmatpush1.msra.mxu0 0.0
    %2029 = vmatprep.subr.mxu0 0.0
    %2030 = vmatpush1.msra.mxu0 0.0
    %2031 = vmatprep.subr.mxu0 0.0
    %2032 = vmatpush1.msra.mxu0 0.0
    %2033 = vmatprep.subr.mxu0 0.0
    %2034 = vmatpush1.msra.mxu0 0.0
    %2035 = vmatprep.subr.mxu0 0.0
    %2036 = vmatpush1.msra.mxu0 0.0
    %2037 = vmatprep.subr.mxu0 0.0
    %2038 = vmatpush1.msra.mxu0 0.0
    %2039 = vmatprep.subr.mxu0 0.0
    %2040 = vmatpush1.msra.mxu0 0.0
    %2041 = vmatprep.subr.mxu0 0.0
    %2042 = vmatpush1.msra.mxu0 0.0
    %2043 = vmatprep.subr.mxu0 0.0
    %2044 = vmatpush1.msra.mxu0 0.0
    %2045 = vmatprep.subr.mxu0 0.0
    %2046 = vmatpush1.msra.mxu0 0.0
    %2047 = vmatprep.subr.mxu0 0.0
    %2048 = vmatpush1.msra.mxu0 0.0
    %2049 = vmatprep.subr.mxu0 0.0
    %2050 = vmatpush1.msra.mxu0 0.0
    %2051 = vmatprep.subr.mxu0 0.0
    %2052 = vmatpush1.msra.mxu0 0.0
    %2053 = vmatprep.subr.mxu0 0.0
    %2054 = vmatpush1.msra.mxu0 0.0
    %2055 = vmatprep.subr.mxu0 0.0
    %2056 = vmatpush1.msra.mxu0 0.0
    %2057 = vmatprep.subr.mxu0 0.0
    %2058 = vmatpush1.msra.mxu0 0.0
    %2059 = vmatprep.subr.mxu0 0.0
    %2060 = vmatpush1.msra.mxu0 0.0
    %2061 = vmatprep.subr.mxu0 0.0
    %2062 = vmatpush1.msra.mxu0 0.0
    %2063 = vmatprep.subr.mxu0 0.0
    %2064 = vmatpush1.msra.mxu0 0.0
    %2065 = vmatprep.mubr.f32.mxu0 0.0
    %2066 = vmatmul.mubr.f32.gmra.mrb[0].mxu0 %v1994
    %v2067 = vpop.f32.mrb[0].mxu0
    %v2068 = vadd.f32 %v1983, %v2067
    %v2069 = vpop.f32.mrb[0].mxu0
    %v2070 = vadd.f32 %v1987, %v2069
    %2071 = vdwg.mxu0
    %v2072 = vxor.u32 %v2068, 2147483648
    %v2073 = vxor.u32 %v2070, 2147483648
    %v2074 = vmul.f32 %v2072, 1.442695
    %v2075 = vpow.pop %v2074
    %v2076 = vmul.f32 %v2073, 1.442695
    %v2077 = vpow.pop %v2076
    %v2078 = vadd.f32 %v2075, 1.0
    %v2079 = vadd.f32 %v2077, 1.0
    %v2080 = vrcp.pop %v2078
    %v2081 = vmul.f32 1.0, %v2080
    %v2082 = vrcp.pop %v2079
    %v2083 = vmul.f32 1.0, %v2082
    %v2084 = vld [vmem:[%s12] sm:$0xff]
    %v2085 = vld [vmem:[%s12 + $0x8] sm:$0xff]
    %v2086 = vld [vmem:[%s12 + $0x10] sm:$0xff]
    %v2087 = vld [vmem:[%s12 + $0x18] sm:$0xff]
    %vm2088 = vcmask 15360
    %v2090 = vsel %vm2088, %v2084, 0
    %v2093 = vsel %vm2088, %v2085, 0
    %v2096 = vsel %vm2088, %v2086, 0
    %v2099 = vsel %vm2088, %v2087, 0
    %vm2101 = vcmask 1041408
    %v2103 = vsel %vm2101, %v2081, 0
    %v2106 = vsel %vm2101, %v2083, 0
    %2108 = vmatprep.subr.mxu0 %v2106
    %2109 = vmatpush1.msra.mxu0 %v2103
    %2110 = vmatprep.subr.mxu0 0.0
    %2111 = vmatpush1.msra.mxu0 0.0
    %2112 = vmatprep.subr.mxu0 0.0
    %2113 = vmatpush1.msra.mxu0 0.0
    %2114 = vmatprep.subr.mxu0 0.0
    %2115 = vmatpush1.msra.mxu0 0.0
    %2116 = vmatprep.subr.mxu0 0.0
    %2117 = vmatpush1.msra.mxu0 0.0
    %2118 = vmatprep.subr.mxu0 0.0
    %2119 = vmatpush1.msra.mxu0 0.0
    %2120 = vmatprep.subr.mxu0 0.0
    %2121 = vmatpush1.msra.mxu0 0.0
    %2122 = vmatprep.subr.mxu0 0.0
    %2123 = vmatpush1.msra.mxu0 0.0
    %2124 = vmatprep.subr.mxu0 0.0
    %2125 = vmatpush1.msra.mxu0 0.0
    %2126 = vmatprep.subr.mxu0 0.0
    %2127 = vmatpush1.msra.mxu0 0.0
    %2128 = vmatprep.subr.mxu0 0.0
    %2129 = vmatpush1.msra.mxu0 0.0
    %2130 = vmatprep.subr.mxu0 0.0
    %2131 = vmatpush1.msra.mxu0 0.0
    %2132 = vmatprep.subr.mxu0 0.0
    %2133 = vmatpush1.msra.mxu0 0.0
    %2134 = vmatprep.subr.mxu0 0.0
    %2135 = vmatpush1.msra.mxu0 0.0
    %2136 = vmatprep.subr.mxu0 0.0
    %2137 = vmatpush1.msra.mxu0 0.0
    %2138 = vmatprep.subr.mxu0 0.0
    %2139 = vmatpush1.msra.mxu0 0.0
    %2140 = vmatprep.subr.mxu0 0.0
    %2141 = vmatpush1.msra.mxu0 0.0
    %2142 = vmatprep.subr.mxu0 0.0
    %2143 = vmatpush1.msra.mxu0 0.0
    %2144 = vmatprep.subr.mxu0 0.0
    %2145 = vmatpush1.msra.mxu0 0.0
    %2146 = vmatprep.subr.mxu0 0.0
    %2147 = vmatpush1.msra.mxu0 0.0
    %2148 = vmatprep.subr.mxu0 0.0
    %2149 = vmatpush1.msra.mxu0 0.0
    %2150 = vmatprep.subr.mxu0 0.0
    %2151 = vmatpush1.msra.mxu0 0.0
    %2152 = vmatprep.subr.mxu0 0.0
    %2153 = vmatpush1.msra.mxu0 0.0
    %2154 = vmatprep.subr.mxu0 0.0
    %2155 = vmatpush1.msra.mxu0 0.0
    %2156 = vmatprep.subr.mxu0 0.0
    %2157 = vmatpush1.msra.mxu0 0.0
    %2158 = vmatprep.subr.mxu0 0.0
    %2159 = vmatpush1.msra.mxu0 0.0
    %2160 = vmatprep.subr.mxu0 0.0
    %2161 = vmatpush1.msra.mxu0 0.0
    %2162 = vmatprep.subr.mxu0 0.0
    %2163 = vmatpush1.msra.mxu0 0.0
    %2164 = vmatprep.subr.mxu0 0.0
    %2165 = vmatpush1.msra.mxu0 0.0
    %2166 = vmatprep.subr.mxu0 0.0
    %2167 = vmatpush1.msra.mxu0 0.0
    %2168 = vmatprep.subr.mxu0 0.0
    %2169 = vmatpush1.msra.mxu0 0.0
    %2170 = vmatprep.subr.mxu0 0.0
    %2171 = vmatpush1.msra.mxu0 0.0
    %2172 = vmatprep.mubr.f32.mxu0 0.0
    %2173 = vmatmul.mubr.f32.gmra.mrb[0].mxu0 %v2090
    %v2174 = vpop.f32.mrb[0].mxu0
    %v2175 = vadd.f32 0.0, %v2174
    %v2176 = vpop.f32.mrb[0].mxu0
    %v2177 = vadd.f32 0.0, %v2176
    %2178 = vmatprep.mubr.f32.mxu0 0.0
    %2179 = vmatmul.mubr.f32.gmra.mrb[0].mxu0 %v2093
    %v2180 = vpop.f32.mrb[0].mxu0
    %v2181 = vadd.f32 0.0, %v2180
    %v2182 = vpop.f32.mrb[0].mxu0
    %v2183 = vadd.f32 0.0, %v2182
    %2184 = vmatprep.mubr.f32.mxu0 0.0
    %2185 = vmatmul.mubr.f32.gmra.mrb[0].mxu0 %v2096
    %v2186 = vpop.f32.mrb[0].mxu0
    %v2187 = vadd.f32 0.0, %v2186
    %v2188 = vpop.f32.mrb[0].mxu0
    %v2189 = vadd.f32 0.0, %v2188
    %2190 = vmatprep.mubr.f32.mxu0 0.0
    %2191 = vmatmul.mubr.f32.gmra.mrb[0].mxu0 %v2099
    %v2192 = vpop.f32.mrb[0].mxu0
    %v2193 = vadd.f32 0.0, %v2192
    %v2194 = vpop.f32.mrb[0].mxu0
    %v2195 = vadd.f32 0.0, %v2194
    %2196 = vdwg.mxu0
    %v2197 = vmul.f32 %v1783, %v2175
    %v2198 = vmul.f32 %v1784, %v2177
    %v2199 = vmul.f32 %v1785, %v2181
    %v2200 = vmul.f32 %v1786, %v2183
    %v2201 = vmul.f32 %v1787, %v2187
    %v2202 = vmul.f32 %v1788, %v2189
    %v2203 = vmul.f32 %v1789, %v2193
    %v2204 = vmul.f32 %v1790, %v2195
    %v2205 = vadd.f32 %v2197, %v73
    %v2206 = vadd.f32 %v2198, %v74
    %v2207 = vadd.f32 %v2199, %v75
    %v2208 = vadd.f32 %v2200, %v76
    %v2209 = vadd.f32 %v2201, %v77
    %v2210 = vadd.f32 %v2202, %v78
    %v2211 = vadd.f32 %v2203, %v79
    %v2212 = vadd.f32 %v2204, %v80
    %2213 = vst [vmem:[#allocation7] sm:$0xff] %v2205
    %2214 = vst [vmem:[#allocation7 + $0x8] sm:$0xff] %v2206
    %2215 = vst [vmem:[#allocation7 + $0x10] sm:$0xff] %v2207
    %2216 = vst [vmem:[#allocation7 + $0x18] sm:$0xff] %v2208
    %2217 = vst [vmem:[#allocation7 + $0x20] sm:$0xff] %v2209
    %2218 = vst [vmem:[#allocation7 + $0x28] sm:$0xff] %v2210
    %2219 = vst [vmem:[#allocation7 + $0x30] sm:$0xff] %v2211
    %2220 = vst [vmem:[#allocation7 + $0x38] sm:$0xff] %v2212
    // Predicated region
    $region62: #{tpu_custom_call.1} parent=1 // pred_check
      _
    $region63: #{tpu_custom_call.1} parent=1 // pred_check_branch
      %2222 = sbr.rel (0) target = $region65
    $region64: #{tpu_custom_call.1} parent=1 // pred_region
      %s2224 = ssub.s32 1024, 1024
      %2225 = vsyncadd [#allocation4], %s2224
      %s2226 = sshll.u32 [#allocation7], 4
      %s2227 = int_to_ptr.vmem [resolvable:$true] %s2226
      %2232 = dma.vmem_to_hbm [thread:$0]  %s2227, 1024, %s13, [#allocation4], 256, 256, 16
    $region65: #{tpu_custom_call.1} parent=1 // pred_fallthru
      _
    // Predicated region
    $region66: #{tpu_custom_call.1} parent=1 // pred_check
      _
    $region67: #{tpu_custom_call.1} parent=1 // pred_check_branch
      %2234 = sbr.rel (0) target = $region69
    $region68: #{tpu_custom_call.1} parent=1 // pred_region
      %2235 = dma.done [#allocation4], 1024
    $region69: #{tpu_custom_call.1} parent=1 // pred_fallthru
      _
    %2236 = vsyncpa [#allocation3], 1
    %2237 = vsyncpa [#allocation6], 1
    %2238 = vsyncpa [#allocation4], 1

</llo_original>
